<compile_context>
chip_gen: v6e
topology: v6e:2x2x1
jax: 0.10.0
libtpu: 0.0.40
codegen_flags: <defaults>
</compile_context>

<pallas_src>
import functools
import math

import jax
import jax.numpy as jnp
from jax import lax
from jax.experimental import pallas as pl
from jax.experimental.pallas import tpu as pltpu

T_LAYER = 12
S_LAYER = 6
STRIDE = 2

_INPUT_VMEM_BUDGET = 28 * 1024 * 1024   # accounted per-step VMEM for tile sizing
_VMEM_LIMIT_CAP = 44 * 1024 * 1024      # stays inside v7x's 64 MiB physical VMEM
_DEFAULT_SCOPED_VMEM = 12 * 1024 * 1024 # below this, keep the compiler default


def _fsp_loss_kernel(x_ref, y_ref, out_ref, gx_acc, gy_acc, *,
                     d, tile_r, rem, pairs):
    """VPU pairwise Gram accumulation.

    x_ref, y_ref: (s_layer, tile_r, 128) blocks (native dtype, lane-dense).
    out_ref:      (1, 1) f32 in SMEM.
    gx_acc/gy_acc:(n_pairs, 8, 128) f32 partial-sum accumulators (VMEM).
    rem:          number of valid 128-lane rows in the LAST grid step.
    """
    k = pl.program_id(0)
    last = pl.num_programs(0) - 1

    @pl.when(k == 0)
    def _init():
        gx_acc[...] = jnp.zeros_like(gx_acc)
        gy_acc[...] = jnp.zeros_like(gy_acc)

    def _accumulate(mask_tail):
        xf = x_ref[...].astype(jnp.float32)      # (s, tile_r, 128)
        yf = y_ref[...].astype(jnp.float32)
        if mask_tail:
            # Only the last grid step is ragged: rows >= rem hold either the
            # next (skipped) teacher layer or out-of-bounds block padding.
            row = lax.broadcasted_iota(jnp.int32, xf.shape, 1)
            keep = row < rem
            xf = jnp.where(keep, xf, 0.0)
            yf = jnp.where(keep, yf, 0.0)
        # Strict-upper Gram pairs: pure VPU mul + vreg adds folded into an
        # (8, 128) f32 accumulator per pair (no MXU, no per-step XLU reduce).
        for p, (i, j) in enumerate(pairs):
            px = (xf[i] * xf[j]).reshape(tile_r // 8, 8, 128)
            gx_acc[p] += jnp.sum(px, axis=0)
            py = (yf[i] * yf[j]).reshape(tile_r // 8, 8, 128)
            gy_acc[p] += jnp.sum(py, axis=0)

    if rem < tile_r:
        @pl.when(k != last)
        def _steady():
            _accumulate(mask_tail=False)

        @pl.when(k == last)
        def _tail():
            _accumulate(mask_tail=True)
    else:
        _accumulate(mask_tail=False)

    @pl.when(k == last)
    def _finalize():
        n_pairs = len(pairs)
        inv_d = 1.0 / float(d)
        total = 0.0
        for p in range(n_pairs):
            dp = gy_acc[p] - gx_acc[p]           # (8, 128) f32
            sp = jnp.sum(dp) * inv_d             # scalar Gram-difference entry
            total = total + sp * sp
        out_ref[0, 0] = total * (1.0 / float(n_pairs))


def fsp_loss(y, x, *, t_layer=T_LAYER, s_layer=S_LAYER, stride=STRIDE,
             tile_r=None):
    assert x.shape[0] == t_layer and y.shape[0] == s_layer
    assert x.shape[1:] == y.shape[1:]
    assert x.dtype == y.dtype, "x / y dtypes must match"
    assert s_layer >= 2, "FSP loss needs at least two layers"
    assert len(range(0, t_layer, stride)) == s_layer

    d = math.prod(y.shape[1:])
    itemsize = jnp.dtype(x.dtype).itemsize
    pairs = tuple((i, j) for i in range(s_layer) for j in range(i + 1, s_layer))
    n_pairs = len(pairs)

    r_true = d // 128
    free_view = (d % 128 == 0 and t_layer == s_layer * stride and r_true >= 8)
    if free_view:
        # Free view: row i of x.reshape(s, stride*d) holds layers
        # [i*stride .. i*stride+stride-1]; its first d//128 lane-chunks are
        # exactly selected layer i*stride.  No gather, no extra HBM pass.
        x3 = x.reshape(s_layer, (stride * d) // 128, 128)
        y3 = y.reshape(s_layer, r_true, 128)
        r_grid = r_true       # rows the grid iterates over
        r_valid = r_true      # rows holding real (selected-layer) data
    else:
        # TODO(synk): fallback (D % 128 != 0, tiny D, or t_layer !=
        # s_layer*stride) materializes the layer selection + zero pad: one
        # extra HBM pass, but correct for arbitrary shapes.
        d_pad = -(-d // 1024) * 1024
        x_flat = x[0:t_layer:stride].reshape(s_layer, d)
        y_flat = y.reshape(s_layer, d)
        if d_pad != d:
            x_flat = jnp.pad(x_flat, ((0, 0), (0, d_pad - d)))
            y_flat = jnp.pad(y_flat, ((0, 0), (0, d_pad - d)))
        r_grid = d_pad // 128
        r_valid = r_grid      # padded columns are zeros -> contribute nothing
        x3 = x_flat.reshape(s_layer, r_grid, 128)
        y3 = y_flat.reshape(s_layer, r_grid, 128)

    # Tile sizing: 2x double-buffered raw input blocks + in-kernel f32 upcast
    # temporaries (per unit of tile_r).
    per_row_bytes = s_layer * 128 * (4 * itemsize + 2 * 4)
    if tile_r is None:
        tile_r = _INPUT_VMEM_BUDGET // per_row_bytes
    tile_r = max(8, (min(int(tile_r), r_grid) // 8) * 8)

    n_steps = -(-r_grid // tile_r)
    rem = r_valid - (n_steps - 1) * tile_r       # valid rows in the last step
    assert 0 < rem <= tile_r

    acct_bytes = (per_row_bytes * tile_r
                  + 2 * n_pairs * 8 * 128 * 4     # Gram accumulators
                  + 2 * tile_r * 128 * 4)         # live pair-product temps
    vmem_limit = None
    if acct_bytes > _DEFAULT_SCOPED_VMEM:
        vmem_limit = min(_VMEM_LIMIT_CAP, acct_bytes + 12 * 1024 * 1024)

    kernel = functools.partial(_fsp_loss_kernel, d=d, tile_r=tile_r,
                               rem=rem, pairs=pairs)
    cost = pl.CostEstimate(
        flops=4 * n_pairs * d,
        transcendentals=0,
        bytes_accessed=2 * s_layer * d * itemsize + 4)

    out = pl.pallas_call(
        kernel,
        out_shape=jax.ShapeDtypeStruct((1, 1), jnp.float32),
        grid_spec=pltpu.PrefetchScalarGridSpec(
            num_scalar_prefetch=0,
            grid=(n_steps,),
            in_specs=[
                pl.BlockSpec((s_layer, tile_r, 128), lambda k: (0, k, 0)),
                pl.BlockSpec((s_layer, tile_r, 128), lambda k: (0, k, 0)),
            ],
            out_specs=pl.BlockSpec((1, 1), lambda k: (0, 0),
                                   memory_space=pltpu.MemorySpace.SMEM),
            scratch_shapes=[
                pltpu.VMEM((n_pairs, 8, 128), jnp.float32),
                pltpu.VMEM((n_pairs, 8, 128), jnp.float32),
            ],
        ),
        compiler_params=pltpu.CompilerParams(
            dimension_semantics=("arbitrary",),   # resident Gram accumulators
            vmem_limit_bytes=vmem_limit,
        ),
        cost_estimate=cost,
    )(x3, y3)
    return out[0, 0]


def fsp_loss_ref(y, x, *, t_layer=T_LAYER, s_layer=S_LAYER, stride=STRIDE):
    # Pure-JAX reference for correctness checking (f32 math).
    x_sel = x[0:t_layer:stride]
    xf = x_sel.reshape(s_layer, -1).astype(jnp.float32)
    yf = y.reshape(s_layer, -1).astype(jnp.float32)
    d = xf.shape[-1]
    gx = (xf @ xf.T) / d
    gy = (yf @ yf.T) / d
    mask = jnp.triu(jnp.ones((s_layer, s_layer), dtype=bool), k=1)
    sq = jnp.where(mask, (gy - gx) ** 2, 0.0)
    return jnp.sum(sq) / (s_layer * (s_layer - 1) // 2)


if __name__ == "__main__":
    key = jax.random.PRNGKey(0)
    ks = jax.random.split(key, 8)
    B, S = 2, 8

    def check(y, x, rtol, atol, **kw):
        out = jax.block_until_ready(fsp_loss(y, x, **kw))
        ref = fsp_loss_ref(y, x)
        assert jnp.allclose(out, ref, rtol=rtol, atol=atol), (out, ref, kw)

    # 1) Lane-aligned D, free-view (no-copy) path, single grid step.
    x1 = jax.random.normal(ks[0], (T_LAYER, B, S, 128), dtype=jnp.float32)
    y1 = jax.random.normal(ks[1], (S_LAYER, B, S, 128), dtype=jnp.float32)
    check(y1, x1, 1e-4, 1e-6)

    # 2) Forced multi-step accumulation (tile_r=8 -> 2 grid steps).
    check(y1, x1, 1e-4, 1e-6, tile_r=8)

    # 3) Ragged (masked) last step on the free-view path (R=18).
    x2 = jax.random.normal(ks[2], (T_LAYER, B, S, 144), dtype=jnp.float32)
    y2 = jax.random.normal(ks[3], (S_LAYER, B, S, 144), dtype=jnp.float32)
    check(y2, x2, 1e-4, 1e-6)            # tile_r=16, 2 steps, rem=2
    check(y2, x2, 1e-4, 1e-6, tile_r=8)  # 3 steps, rem=2

    # 4) D not a multiple of 128 / tiny D -> gather + zero-pad fallback path.
    x3 = jax.random.normal(ks[4], (T_LAYER, B, S, 33), dtype=jnp.float32)
    y3 = jax.random.normal(ks[5], (S_LAYER, B, S, 33), dtype=jnp.float32)
    check(y3, x3, 1e-4, 1e-6)
    x4 = jax.random.normal(ks[6], (T_LAYER, B, S, 32), dtype=jnp.float32)
    y4 = jax.random.normal(ks[7], (S_LAYER, B, S, 32), dtype=jnp.float32)
    check(y4, x4, 1e-4, 1e-6)

    # 5) Native bf16 inputs (in-kernel f32 upcast + f32 accumulation).
    check(y1.astype(jnp.bfloat16), x1.astype(jnp.bfloat16), 1e-2, 1e-4)

    print("KERNEL_OK")
</pallas_src>

<mosaic_0001>
module attributes {stable_mosaic.version = 11 : i64} {
  func.func @_fsp_loss_kernel(%arg0: i32, %arg1: memref<6x16x128xf32, #tpu.memory_space<vmem>>, %arg2: memref<6x16x128xf32, #tpu.memory_space<vmem>>, %arg3: memref<1x1xf32, #tpu.memory_space<smem>>, %arg4: memref<15x8x128xf32, #tpu.memory_space<vmem>>, %arg5: memref<15x8x128xf32, #tpu.memory_space<vmem>>) attributes {dimension_semantics = [#tpu.dimension_semantics<arbitrary>], iteration_bounds = array<i64: 1>, scalar_prefetch = 0 : i64, scratch_operands = 2 : i64, tpu.core_type = #tpu.core_type<tc>, window_params = [{transform_indices = @transform_0, window_bounds = array<i64: 6, 16, 128>}, {transform_indices = @transform_1, window_bounds = array<i64: 6, 16, 128>}, {transform_indices = @transform_2, window_bounds = array<i64: 1, 1>}]} {
    %c0_i32 = arith.constant 0 : i32
    %0 = arith.cmpi eq, %arg0, %c0_i32 : i32
    %1 = arith.extui %0 : i1 to i32
    %c0_i32_0 = arith.constant 0 : i32
    %2 = arith.cmpi ne, %1, %c0_i32_0 : i32
    scf.if %2 {
      %cst_203 = arith.constant 0.000000e+00 : f32
      %398 = vector.broadcast %cst_203 : f32 to vector<15x8x128xf32>
      %c0_204 = arith.constant 0 : index
      %c0_205 = arith.constant 0 : index
      %c0_206 = arith.constant 0 : index
      %399 = vector.load %arg4[%c0_204, %c0_205, %c0_206] : memref<15x8x128xf32, #tpu.memory_space<vmem>>, vector<15x8x128xf32>
      tpu.vector_store %arg4[%c0_204, %c0_205, %c0_206], %398 {strides = array<i32>} : memref<15x8x128xf32, #tpu.memory_space<vmem>>, vector<15x8x128xf32>,
      %cst_207 = arith.constant 0.000000e+00 : f32
      %400 = vector.broadcast %cst_207 : f32 to vector<15x8x128xf32>
      %c0_208 = arith.constant 0 : index
      %c0_209 = arith.constant 0 : index
      %c0_210 = arith.constant 0 : index
      %401 = vector.load %arg5[%c0_208, %c0_209, %c0_210] : memref<15x8x128xf32, #tpu.memory_space<vmem>>, vector<15x8x128xf32>
      tpu.vector_store %arg5[%c0_208, %c0_209, %c0_210], %400 {strides = array<i32>} : memref<15x8x128xf32, #tpu.memory_space<vmem>>, vector<15x8x128xf32>,
    } else {
    }
    %c0 = arith.constant 0 : index
    %c0_1 = arith.constant 0 : index
    %c0_2 = arith.constant 0 : index
    %3 = vector.load %arg1[%c0, %c0_1, %c0_2] : memref<6x16x128xf32, #tpu.memory_space<vmem>>, vector<6x16x128xf32>
    %c0_3 = arith.constant 0 : index
    %c0_4 = arith.constant 0 : index
    %c0_5 = arith.constant 0 : index
    %4 = vector.load %arg2[%c0_3, %c0_4, %c0_5] : memref<6x16x128xf32, #tpu.memory_space<vmem>>, vector<6x16x128xf32>
    %5 = vector.extract_strided_slice %3 {offsets = [0, 0, 0], sizes = [1, 16, 128], strides = [1, 1, 1]} : vector<6x16x128xf32> to vector<1x16x128xf32>
    %6 = vector.shape_cast %5 : vector<1x16x128xf32> to vector<16x128xf32>
    %7 = vector.extract_strided_slice %3 {offsets = [1, 0, 0], sizes = [1, 16, 128], strides = [1, 1, 1]} : vector<6x16x128xf32> to vector<1x16x128xf32>
    %8 = vector.shape_cast %7 : vector<1x16x128xf32> to vector<16x128xf32>
    %9 = arith.mulf %6, %8 : vector<16x128xf32>
    %10 = vector.shape_cast %9 : vector<16x128xf32> to vector<2x8x128xf32>
    %c0_6 = arith.constant 0 : index
    %c0_7 = arith.constant 0 : index
    %c0_8 = arith.constant 0 : index
    %11 = vector.load %arg4[%c0_6, %c0_7, %c0_8] : memref<15x8x128xf32, #tpu.memory_space<vmem>>, vector<1x8x128xf32>
    %12 = vector.shape_cast %11 : vector<1x8x128xf32> to vector<8x128xf32>
    %cst = arith.constant dense<0.000000e+00> : vector<8x128xf32>
    %13 = vector.multi_reduction <add>, %10, %cst [0] : vector<2x8x128xf32> to vector<8x128xf32>
    %14 = arith.addf %12, %13 : vector<8x128xf32>
    %c0_9 = arith.constant 0 : index
    %c0_10 = arith.constant 0 : index
    %c0_11 = arith.constant 0 : index
    %15 = vector.load %arg4[%c0_9, %c0_10, %c0_11] : memref<15x8x128xf32, #tpu.memory_space<vmem>>, vector<1x8x128xf32>
    %16 = vector.shape_cast %15 : vector<1x8x128xf32> to vector<8x128xf32>
    %17 = vector.shape_cast %14 : vector<8x128xf32> to vector<1x8x128xf32>
    tpu.vector_store %arg4[%c0_9, %c0_10, %c0_11], %17 {strides = array<i32>} : memref<15x8x128xf32, #tpu.memory_space<vmem>>, vector<1x8x128xf32>,
    %18 = vector.extract_strided_slice %4 {offsets = [0, 0, 0], sizes = [1, 16, 128], strides = [1, 1, 1]} : vector<6x16x128xf32> to vector<1x16x128xf32>
    %19 = vector.shape_cast %18 : vector<1x16x128xf32> to vector<16x128xf32>
    %20 = vector.extract_strided_slice %4 {offsets = [1, 0, 0], sizes = [1, 16, 128], strides = [1, 1, 1]} : vector<6x16x128xf32> to vector<1x16x128xf32>
    %21 = vector.shape_cast %20 : vector<1x16x128xf32> to vector<16x128xf32>
    %22 = arith.mulf %19, %21 : vector<16x128xf32>
    %23 = vector.shape_cast %22 : vector<16x128xf32> to vector<2x8x128xf32>
    %c0_12 = arith.constant 0 : index
    %c0_13 = arith.constant 0 : index
    %c0_14 = arith.constant 0 : index
    %24 = vector.load %arg5[%c0_12, %c0_13, %c0_14] : memref<15x8x128xf32, #tpu.memory_space<vmem>>, vector<1x8x128xf32>
    %25 = vector.shape_cast %24 : vector<1x8x128xf32> to vector<8x128xf32>
    %cst_15 = arith.constant dense<0.000000e+00> : vector<8x128xf32>
    %26 = vector.multi_reduction <add>, %23, %cst_15 [0] : vector<2x8x128xf32> to vector<8x128xf32>
    %27 = arith.addf %25, %26 : vector<8x128xf32>
    %c0_16 = arith.constant 0 : index
    %c0_17 = arith.constant 0 : index
    %c0_18 = arith.constant 0 : index
    %28 = vector.load %arg5[%c0_16, %c0_17, %c0_18] : memref<15x8x128xf32, #tpu.memory_space<vmem>>, vector<1x8x128xf32>
    %29 = vector.shape_cast %28 : vector<1x8x128xf32> to vector<8x128xf32>
    %30 = vector.shape_cast %27 : vector<8x128xf32> to vector<1x8x128xf32>
    tpu.vector_store %arg5[%c0_16, %c0_17, %c0_18], %30 {strides = array<i32>} : memref<15x8x128xf32, #tpu.memory_space<vmem>>, vector<1x8x128xf32>,
    %31 = vector.extract_strided_slice %3 {offsets = [0, 0, 0], sizes = [1, 16, 128], strides = [1, 1, 1]} : vector<6x16x128xf32> to vector<1x16x128xf32>
    %32 = vector.shape_cast %31 : vector<1x16x128xf32> to vector<16x128xf32>
    %33 = vector.extract_strided_slice %3 {offsets = [2, 0, 0], sizes = [1, 16, 128], strides = [1, 1, 1]} : vector<6x16x128xf32> to vector<1x16x128xf32>
    %34 = vector.shape_cast %33 : vector<1x16x128xf32> to vector<16x128xf32>
    %35 = arith.mulf %32, %34 : vector<16x128xf32>
    %36 = vector.shape_cast %35 : vector<16x128xf32> to vector<2x8x128xf32>
    %c1 = arith.constant 1 : index
    %c0_19 = arith.constant 0 : index
    %c0_20 = arith.constant 0 : index
    %37 = vector.load %arg4[%c1, %c0_19, %c0_20] : memref<15x8x128xf32, #tpu.memory_space<vmem>>, vector<1x8x128xf32>
    %38 = vector.shape_cast %37 : vector<1x8x128xf32> to vector<8x128xf32>
    %cst_21 = arith.constant dense<0.000000e+00> : vector<8x128xf32>
    %39 = vector.multi_reduction <add>, %36, %cst_21 [0] : vector<2x8x128xf32> to vector<8x128xf32>
    %40 = arith.addf %38, %39 : vector<8x128xf32>
    %c1_22 = arith.constant 1 : index
    %c0_23 = arith.constant 0 : index
    %c0_24 = arith.constant 0 : index
    %41 = vector.load %arg4[%c1_22, %c0_23, %c0_24] : memref<15x8x128xf32, #tpu.memory_space<vmem>>, vector<1x8x128xf32>
    %42 = vector.shape_cast %41 : vector<1x8x128xf32> to vector<8x128xf32>
    %43 = vector.shape_cast %40 : vector<8x128xf32> to vector<1x8x128xf32>
    tpu.vector_store %arg4[%c1_22, %c0_23, %c0_24], %43 {strides = array<i32>} : memref<15x8x128xf32, #tpu.memory_space<vmem>>, vector<1x8x128xf32>,
    %44 = vector.extract_strided_slice %4 {offsets = [0, 0, 0], sizes = [1, 16, 128], strides = [1, 1, 1]} : vector<6x16x128xf32> to vector<1x16x128xf32>
    %45 = vector.shape_cast %44 : vector<1x16x128xf32> to vector<16x128xf32>
    %46 = vector.extract_strided_slice %4 {offsets = [2, 0, 0], sizes = [1, 16, 128], strides = [1, 1, 1]} : vector<6x16x128xf32> to vector<1x16x128xf32>
    %47 = vector.shape_cast %46 : vector<1x16x128xf32> to vector<16x128xf32>
    %48 = arith.mulf %45, %47 : vector<16x128xf32>
    %49 = vector.shape_cast %48 : vector<16x128xf32> to vector<2x8x128xf32>
    %c1_25 = arith.constant 1 : index
    %c0_26 = arith.constant 0 : index
    %c0_27 = arith.constant 0 : index
    %50 = vector.load %arg5[%c1_25, %c0_26, %c0_27] : memref<15x8x128xf32, #tpu.memory_space<vmem>>, vector<1x8x128xf32>
    %51 = vector.shape_cast %50 : vector<1x8x128xf32> to vector<8x128xf32>
    %cst_28 = arith.constant dense<0.000000e+00> : vector<8x128xf32>
    %52 = vector.multi_reduction <add>, %49, %cst_28 [0] : vector<2x8x128xf32> to vector<8x128xf32>
    %53 = arith.addf %51, %52 : vector<8x128xf32>
    %c1_29 = arith.constant 1 : index
    %c0_30 = arith.constant 0 : index
    %c0_31 = arith.constant 0 : index
    %54 = vector.load %arg5[%c1_29, %c0_30, %c0_31] : memref<15x8x128xf32, #tpu.memory_space<vmem>>, vector<1x8x128xf32>
    %55 = vector.shape_cast %54 : vector<1x8x128xf32> to vector<8x128xf32>
    %56 = vector.shape_cast %53 : vector<8x128xf32> to vector<1x8x128xf32>
    tpu.vector_store %arg5[%c1_29, %c0_30, %c0_31], %56 {strides = array<i32>} : memref<15x8x128xf32, #tpu.memory_space<vmem>>, vector<1x8x128xf32>,
    %57 = vector.extract_strided_slice %3 {offsets = [0, 0, 0], sizes = [1, 16, 128], strides = [1, 1, 1]} : vector<6x16x128xf32> to vector<1x16x128xf32>
    %58 = vector.shape_cast %57 : vector<1x16x128xf32> to vector<16x128xf32>
    %59 = vector.extract_strided_slice %3 {offsets = [3, 0, 0], sizes = [1, 16, 128], strides = [1, 1, 1]} : vector<6x16x128xf32> to vector<1x16x128xf32>
    %60 = vector.shape_cast %59 : vector<1x16x128xf32> to vector<16x128xf32>
    %61 = arith.mulf %58, %60 : vector<16x128xf32>
    %62 = vector.shape_cast %61 : vector<16x128xf32> to vector<2x8x128xf32>
    %c2 = arith.constant 2 : index
    %c0_32 = arith.constant 0 : index
    %c0_33 = arith.constant 0 : index
    %63 = vector.load %arg4[%c2, %c0_32, %c0_33] : memref<15x8x128xf32, #tpu.memory_space<vmem>>, vector<1x8x128xf32>
    %64 = vector.shape_cast %63 : vector<1x8x128xf32> to vector<8x128xf32>
    %cst_34 = arith.constant dense<0.000000e+00> : vector<8x128xf32>
    %65 = vector.multi_reduction <add>, %62, %cst_34 [0] : vector<2x8x128xf32> to vector<8x128xf32>
    %66 = arith.addf %64, %65 : vector<8x128xf32>
    %c2_35 = arith.constant 2 : index
    %c0_36 = arith.constant 0 : index
    %c0_37 = arith.constant 0 : index
    %67 = vector.load %arg4[%c2_35, %c0_36, %c0_37] : memref<15x8x128xf32, #tpu.memory_space<vmem>>, vector<1x8x128xf32>
    %68 = vector.shape_cast %67 : vector<1x8x128xf32> to vector<8x128xf32>
    %69 = vector.shape_cast %66 : vector<8x128xf32> to vector<1x8x128xf32>
    tpu.vector_store %arg4[%c2_35, %c0_36, %c0_37], %69 {strides = array<i32>} : memref<15x8x128xf32, #tpu.memory_space<vmem>>, vector<1x8x128xf32>,
    %70 = vector.extract_strided_slice %4 {offsets = [0, 0, 0], sizes = [1, 16, 128], strides = [1, 1, 1]} : vector<6x16x128xf32> to vector<1x16x128xf32>
    %71 = vector.shape_cast %70 : vector<1x16x128xf32> to vector<16x128xf32>
    %72 = vector.extract_strided_slice %4 {offsets = [3, 0, 0], sizes = [1, 16, 128], strides = [1, 1, 1]} : vector<6x16x128xf32> to vector<1x16x128xf32>
    %73 = vector.shape_cast %72 : vector<1x16x128xf32> to vector<16x128xf32>
    %74 = arith.mulf %71, %73 : vector<16x128xf32>
    %75 = vector.shape_cast %74 : vector<16x128xf32> to vector<2x8x128xf32>
    %c2_38 = arith.constant 2 : index
    %c0_39 = arith.constant 0 : index
    %c0_40 = arith.constant 0 : index
    %76 = vector.load %arg5[%c2_38, %c0_39, %c0_40] : memref<15x8x128xf32, #tpu.memory_space<vmem>>, vector<1x8x128xf32>
    %77 = vector.shape_cast %76 : vector<1x8x128xf32> to vector<8x128xf32>
    %cst_41 = arith.constant dense<0.000000e+00> : vector<8x128xf32>
    %78 = vector.multi_reduction <add>, %75, %cst_41 [0] : vector<2x8x128xf32> to vector<8x128xf32>
    %79 = arith.addf %77, %78 : vector<8x128xf32>
    %c2_42 = arith.constant 2 : index
    %c0_43 = arith.constant 0 : index
    %c0_44 = arith.constant 0 : index
    %80 = vector.load %arg5[%c2_42, %c0_43, %c0_44] : memref<15x8x128xf32, #tpu.memory_space<vmem>>, vector<1x8x128xf32>
    %81 = vector.shape_cast %80 : vector<1x8x128xf32> to vector<8x128xf32>
    %82 = vector.shape_cast %79 : vector<8x128xf32> to vector<1x8x128xf32>
    tpu.vector_store %arg5[%c2_42, %c0_43, %c0_44], %82 {strides = array<i32>} : memref<15x8x128xf32, #tpu.memory_space<vmem>>, vector<1x8x128xf32>,
    %83 = vector.extract_strided_slice %3 {offsets = [0, 0, 0], sizes = [1, 16, 128], strides = [1, 1, 1]} : vector<6x16x128xf32> to vector<1x16x128xf32>
    %84 = vector.shape_cast %83 : vector<1x16x128xf32> to vector<16x128xf32>
    %85 = vector.extract_strided_slice %3 {offsets = [4, 0, 0], sizes = [1, 16, 128], strides = [1, 1, 1]} : vector<6x16x128xf32> to vector<1x16x128xf32>
    %86 = vector.shape_cast %85 : vector<1x16x128xf32> to vector<16x128xf32>
    %87 = arith.mulf %84, %86 : vector<16x128xf32>
    %88 = vector.shape_cast %87 : vector<16x128xf32> to vector<2x8x128xf32>
    %c3 = arith.constant 3 : index
    %c0_45 = arith.constant 0 : index
    %c0_46 = arith.constant 0 : index
    %89 = vector.load %arg4[%c3, %c0_45, %c0_46] : memref<15x8x128xf32, #tpu.memory_space<vmem>>, vector<1x8x128xf32>
    %90 = vector.shape_cast %89 : vector<1x8x128xf32> to vector<8x128xf32>
    %cst_47 = arith.constant dense<0.000000e+00> : vector<8x128xf32>
    %91 = vector.multi_reduction <add>, %88, %cst_47 [0] : vector<2x8x128xf32> to vector<8x128xf32>
    %92 = arith.addf %90, %91 : vector<8x128xf32>
    %c3_48 = arith.constant 3 : index
    %c0_49 = arith.constant 0 : index
    %c0_50 = arith.constant 0 : index
    %93 = vector.load %arg4[%c3_48, %c0_49, %c0_50] : memref<15x8x128xf32, #tpu.memory_space<vmem>>, vector<1x8x128xf32>
    %94 = vector.shape_cast %93 : vector<1x8x128xf32> to vector<8x128xf32>
    %95 = vector.shape_cast %92 : vector<8x128xf32> to vector<1x8x128xf32>
    tpu.vector_store %arg4[%c3_48, %c0_49, %c0_50], %95 {strides = array<i32>} : memref<15x8x128xf32, #tpu.memory_space<vmem>>, vector<1x8x128xf32>,
    %96 = vector.extract_strided_slice %4 {offsets = [0, 0, 0], sizes = [1, 16, 128], strides = [1, 1, 1]} : vector<6x16x128xf32> to vector<1x16x128xf32>
    %97 = vector.shape_cast %96 : vector<1x16x128xf32> to vector<16x128xf32>
    %98 = vector.extract_strided_slice %4 {offsets = [4, 0, 0], sizes = [1, 16, 128], strides = [1, 1, 1]} : vector<6x16x128xf32> to vector<1x16x128xf32>
    %99 = vector.shape_cast %98 : vector<1x16x128xf32> to vector<16x128xf32>
    %100 = arith.mulf %97, %99 : vector<16x128xf32>
    %101 = vector.shape_cast %100 : vector<16x128xf32> to vector<2x8x128xf32>
    %c3_51 = arith.constant 3 : index
    %c0_52 = arith.constant 0 : index
    %c0_53 = arith.constant 0 : index
    %102 = vector.load %arg5[%c3_51, %c0_52, %c0_53] : memref<15x8x128xf32, #tpu.memory_space<vmem>>, vector<1x8x128xf32>
    %103 = vector.shape_cast %102 : vector<1x8x128xf32> to vector<8x128xf32>
    %cst_54 = arith.constant dense<0.000000e+00> : vector<8x128xf32>
    %104 = vector.multi_reduction <add>, %101, %cst_54 [0] : vector<2x8x128xf32> to vector<8x128xf32>
    %105 = arith.addf %103, %104 : vector<8x128xf32>
    %c3_55 = arith.constant 3 : index
    %c0_56 = arith.constant 0 : index
    %c0_57 = arith.constant 0 : index
    %106 = vector.load %arg5[%c3_55, %c0_56, %c0_57] : memref<15x8x128xf32, #tpu.memory_space<vmem>>, vector<1x8x128xf32>
    %107 = vector.shape_cast %106 : vector<1x8x128xf32> to vector<8x128xf32>
    %108 = vector.shape_cast %105 : vector<8x128xf32> to vector<1x8x128xf32>
    tpu.vector_store %arg5[%c3_55, %c0_56, %c0_57], %108 {strides = array<i32>} : memref<15x8x128xf32, #tpu.memory_space<vmem>>, vector<1x8x128xf32>,
    %109 = vector.extract_strided_slice %3 {offsets = [0, 0, 0], sizes = [1, 16, 128], strides = [1, 1, 1]} : vector<6x16x128xf32> to vector<1x16x128xf32>
    %110 = vector.shape_cast %109 : vector<1x16x128xf32> to vector<16x128xf32>
    %111 = vector.extract_strided_slice %3 {offsets = [5, 0, 0], sizes = [1, 16, 128], strides = [1, 1, 1]} : vector<6x16x128xf32> to vector<1x16x128xf32>
    %112 = vector.shape_cast %111 : vector<1x16x128xf32> to vector<16x128xf32>
    %113 = arith.mulf %110, %112 : vector<16x128xf32>
    %114 = vector.shape_cast %113 : vector<16x128xf32> to vector<2x8x128xf32>
    %c4 = arith.constant 4 : index
    %c0_58 = arith.constant 0 : index
    %c0_59 = arith.constant 0 : index
    %115 = vector.load %arg4[%c4, %c0_58, %c0_59] : memref<15x8x128xf32, #tpu.memory_space<vmem>>, vector<1x8x128xf32>
    %116 = vector.shape_cast %115 : vector<1x8x128xf32> to vector<8x128xf32>
    %cst_60 = arith.constant dense<0.000000e+00> : vector<8x128xf32>
    %117 = vector.multi_reduction <add>, %114, %cst_60 [0] : vector<2x8x128xf32> to vector<8x128xf32>
    %118 = arith.addf %116, %117 : vector<8x128xf32>
    %c4_61 = arith.constant 4 : index
    %c0_62 = arith.constant 0 : index
    %c0_63 = arith.constant 0 : index
    %119 = vector.load %arg4[%c4_61, %c0_62, %c0_63] : memref<15x8x128xf32, #tpu.memory_space<vmem>>, vector<1x8x128xf32>
    %120 = vector.shape_cast %119 : vector<1x8x128xf32> to vector<8x128xf32>
    %121 = vector.shape_cast %118 : vector<8x128xf32> to vector<1x8x128xf32>
    tpu.vector_store %arg4[%c4_61, %c0_62, %c0_63], %121 {strides = array<i32>} : memref<15x8x128xf32, #tpu.memory_space<vmem>>, vector<1x8x128xf32>,
    %122 = vector.extract_strided_slice %4 {offsets = [0, 0, 0], sizes = [1, 16, 128], strides = [1, 1, 1]} : vector<6x16x128xf32> to vector<1x16x128xf32>
    %123 = vector.shape_cast %122 : vector<1x16x128xf32> to vector<16x128xf32>
    %124 = vector.extract_strided_slice %4 {offsets = [5, 0, 0], sizes = [1, 16, 128], strides = [1, 1, 1]} : vector<6x16x128xf32> to vector<1x16x128xf32>
    %125 = vector.shape_cast %124 : vector<1x16x128xf32> to vector<16x128xf32>
    %126 = arith.mulf %123, %125 : vector<16x128xf32>
    %127 = vector.shape_cast %126 : vector<16x128xf32> to vector<2x8x128xf32>
    %c4_64 = arith.constant 4 : index
    %c0_65 = arith.constant 0 : index
    %c0_66 = arith.constant 0 : index
    %128 = vector.load %arg5[%c4_64, %c0_65, %c0_66] : memref<15x8x128xf32, #tpu.memory_space<vmem>>, vector<1x8x128xf32>
    %129 = vector.shape_cast %128 : vector<1x8x128xf32> to vector<8x128xf32>
    %cst_67 = arith.constant dense<0.000000e+00> : vector<8x128xf32>
    %130 = vector.multi_reduction <add>, %127, %cst_67 [0] : vector<2x8x128xf32> to vector<8x128xf32>
    %131 = arith.addf %129, %130 : vector<8x128xf32>
    %c4_68 = arith.constant 4 : index
    %c0_69 = arith.constant 0 : index
    %c0_70 = arith.constant 0 : index
    %132 = vector.load %arg5[%c4_68, %c0_69, %c0_70] : memref<15x8x128xf32, #tpu.memory_space<vmem>>, vector<1x8x128xf32>
    %133 = vector.shape_cast %132 : vector<1x8x128xf32> to vector<8x128xf32>
    %134 = vector.shape_cast %131 : vector<8x128xf32> to vector<1x8x128xf32>
    tpu.vector_store %arg5[%c4_68, %c0_69, %c0_70], %134 {strides = array<i32>} : memref<15x8x128xf32, #tpu.memory_space<vmem>>, vector<1x8x128xf32>,
    %135 = vector.extract_strided_slice %3 {offsets = [1, 0, 0], sizes = [1, 16, 128], strides = [1, 1, 1]} : vector<6x16x128xf32> to vector<1x16x128xf32>
    %136 = vector.shape_cast %135 : vector<1x16x128xf32> to vector<16x128xf32>
    %137 = vector.extract_strided_slice %3 {offsets = [2, 0, 0], sizes = [1, 16, 128], strides = [1, 1, 1]} : vector<6x16x128xf32> to vector<1x16x128xf32>
    %138 = vector.shape_cast %137 : vector<1x16x128xf32> to vector<16x128xf32>
    %139 = arith.mulf %136, %138 : vector<16x128xf32>
    %140 = vector.shape_cast %139 : vector<16x128xf32> to vector<2x8x128xf32>
    %c5 = arith.constant 5 : index
    %c0_71 = arith.constant 0 : index
    %c0_72 = arith.constant 0 : index
    %141 = vector.load %arg4[%c5, %c0_71, %c0_72] : memref<15x8x128xf32, #tpu.memory_space<vmem>>, vector<1x8x128xf32>
    %142 = vector.shape_cast %141 : vector<1x8x128xf32> to vector<8x128xf32>
    %cst_73 = arith.constant dense<0.000000e+00> : vector<8x128xf32>
    %143 = vector.multi_reduction <add>, %140, %cst_73 [0] : vector<2x8x128xf32> to vector<8x128xf32>
    %144 = arith.addf %142, %143 : vector<8x128xf32>
    %c5_74 = arith.constant 5 : index
    %c0_75 = arith.constant 0 : index
    %c0_76 = arith.constant 0 : index
    %145 = vector.load %arg4[%c5_74, %c0_75, %c0_76] : memref<15x8x128xf32, #tpu.memory_space<vmem>>, vector<1x8x128xf32>
    %146 = vector.shape_cast %145 : vector<1x8x128xf32> to vector<8x128xf32>
    %147 = vector.shape_cast %144 : vector<8x128xf32> to vector<1x8x128xf32>
    tpu.vector_store %arg4[%c5_74, %c0_75, %c0_76], %147 {strides = array<i32>} : memref<15x8x128xf32, #tpu.memory_space<vmem>>, vector<1x8x128xf32>,
    %148 = vector.extract_strided_slice %4 {offsets = [1, 0, 0], sizes = [1, 16, 128], strides = [1, 1, 1]} : vector<6x16x128xf32> to vector<1x16x128xf32>
    %149 = vector.shape_cast %148 : vector<1x16x128xf32> to vector<16x128xf32>
    %150 = vector.extract_strided_slice %4 {offsets = [2, 0, 0], sizes = [1, 16, 128], strides = [1, 1, 1]} : vector<6x16x128xf32> to vector<1x16x128xf32>
    %151 = vector.shape_cast %150 : vector<1x16x128xf32> to vector<16x128xf32>
    %152 = arith.mulf %149, %151 : vector<16x128xf32>
    %153 = vector.shape_cast %152 : vector<16x128xf32> to vector<2x8x128xf32>
    %c5_77 = arith.constant 5 : index
    %c0_78 = arith.constant 0 : index
    %c0_79 = arith.constant 0 : index
    %154 = vector.load %arg5[%c5_77, %c0_78, %c0_79] : memref<15x8x128xf32, #tpu.memory_space<vmem>>, vector<1x8x128xf32>
    %155 = vector.shape_cast %154 : vector<1x8x128xf32> to vector<8x128xf32>
    %cst_80 = arith.constant dense<0.000000e+00> : vector<8x128xf32>
    %156 = vector.multi_reduction <add>, %153, %cst_80 [0] : vector<2x8x128xf32> to vector<8x128xf32>
    %157 = arith.addf %155, %156 : vector<8x128xf32>
    %c5_81 = arith.constant 5 : index
    %c0_82 = arith.constant 0 : index
    %c0_83 = arith.constant 0 : index
    %158 = vector.load %arg5[%c5_81, %c0_82, %c0_83] : memref<15x8x128xf32, #tpu.memory_space<vmem>>, vector<1x8x128xf32>
    %159 = vector.shape_cast %158 : vector<1x8x128xf32> to vector<8x128xf32>
    %160 = vector.shape_cast %157 : vector<8x128xf32> to vector<1x8x128xf32>
    tpu.vector_store %arg5[%c5_81, %c0_82, %c0_83], %160 {strides = array<i32>} : memref<15x8x128xf32, #tpu.memory_space<vmem>>, vector<1x8x128xf32>,
    %161 = vector.extract_strided_slice %3 {offsets = [1, 0, 0], sizes = [1, 16, 128], strides = [1, 1, 1]} : vector<6x16x128xf32> to vector<1x16x128xf32>
    %162 = vector.shape_cast %161 : vector<1x16x128xf32> to vector<16x128xf32>
    %163 = vector.extract_strided_slice %3 {offsets = [3, 0, 0], sizes = [1, 16, 128], strides = [1, 1, 1]} : vector<6x16x128xf32> to vector<1x16x128xf32>
    %164 = vector.shape_cast %163 : vector<1x16x128xf32> to vector<16x128xf32>
    %165 = arith.mulf %162, %164 : vector<16x128xf32>
    %166 = vector.shape_cast %165 : vector<16x128xf32> to vector<2x8x128xf32>
    %c6 = arith.constant 6 : index
    %c0_84 = arith.constant 0 : index
    %c0_85 = arith.constant 0 : index
    %167 = vector.load %arg4[%c6, %c0_84, %c0_85] : memref<15x8x128xf32, #tpu.memory_space<vmem>>, vector<1x8x128xf32>
    %168 = vector.shape_cast %167 : vector<1x8x128xf32> to vector<8x128xf32>
    %cst_86 = arith.constant dense<0.000000e+00> : vector<8x128xf32>
    %169 = vector.multi_reduction <add>, %166, %cst_86 [0] : vector<2x8x128xf32> to vector<8x128xf32>
    %170 = arith.addf %168, %169 : vector<8x128xf32>
    %c6_87 = arith.constant 6 : index
    %c0_88 = arith.constant 0 : index
    %c0_89 = arith.constant 0 : index
    %171 = vector.load %arg4[%c6_87, %c0_88, %c0_89] : memref<15x8x128xf32, #tpu.memory_space<vmem>>, vector<1x8x128xf32>
    %172 = vector.shape_cast %171 : vector<1x8x128xf32> to vector<8x128xf32>
    %173 = vector.shape_cast %170 : vector<8x128xf32> to vector<1x8x128xf32>
    tpu.vector_store %arg4[%c6_87, %c0_88, %c0_89], %173 {strides = array<i32>} : memref<15x8x128xf32, #tpu.memory_space<vmem>>, vector<1x8x128xf32>,
    %174 = vector.extract_strided_slice %4 {offsets = [1, 0, 0], sizes = [1, 16, 128], strides = [1, 1, 1]} : vector<6x16x128xf32> to vector<1x16x128xf32>
    %175 = vector.shape_cast %174 : vector<1x16x128xf32> to vector<16x128xf32>
    %176 = vector.extract_strided_slice %4 {offsets = [3, 0, 0], sizes = [1, 16, 128], strides = [1, 1, 1]} : vector<6x16x128xf32> to vector<1x16x128xf32>
    %177 = vector.shape_cast %176 : vector<1x16x128xf32> to vector<16x128xf32>
    %178 = arith.mulf %175, %177 : vector<16x128xf32>
    %179 = vector.shape_cast %178 : vector<16x128xf32> to vector<2x8x128xf32>
    %c6_90 = arith.constant 6 : index
    %c0_91 = arith.constant 0 : index
    %c0_92 = arith.constant 0 : index
    %180 = vector.load %arg5[%c6_90, %c0_91, %c0_92] : memref<15x8x128xf32, #tpu.memory_space<vmem>>, vector<1x8x128xf32>
    %181 = vector.shape_cast %180 : vector<1x8x128xf32> to vector<8x128xf32>
    %cst_93 = arith.constant dense<0.000000e+00> : vector<8x128xf32>
    %182 = vector.multi_reduction <add>, %179, %cst_93 [0] : vector<2x8x128xf32> to vector<8x128xf32>
    %183 = arith.addf %181, %182 : vector<8x128xf32>
    %c6_94 = arith.constant 6 : index
    %c0_95 = arith.constant 0 : index
    %c0_96 = arith.constant 0 : index
    %184 = vector.load %arg5[%c6_94, %c0_95, %c0_96] : memref<15x8x128xf32, #tpu.memory_space<vmem>>, vector<1x8x128xf32>
    %185 = vector.shape_cast %184 : vector<1x8x128xf32> to vector<8x128xf32>
    %186 = vector.shape_cast %183 : vector<8x128xf32> to vector<1x8x128xf32>
    tpu.vector_store %arg5[%c6_94, %c0_95, %c0_96], %186 {strides = array<i32>} : memref<15x8x128xf32, #tpu.memory_space<vmem>>, vector<1x8x128xf32>,
    %187 = vector.extract_strided_slice %3 {offsets = [1, 0, 0], sizes = [1, 16, 128], strides = [1, 1, 1]} : vector<6x16x128xf32> to vector<1x16x128xf32>
    %188 = vector.shape_cast %187 : vector<1x16x128xf32> to vector<16x128xf32>
    %189 = vector.extract_strided_slice %3 {offsets = [4, 0, 0], sizes = [1, 16, 128], strides = [1, 1, 1]} : vector<6x16x128xf32> to vector<1x16x128xf32>
    %190 = vector.shape_cast %189 : vector<1x16x128xf32> to vector<16x128xf32>
    %191 = arith.mulf %188, %190 : vector<16x128xf32>
    %192 = vector.shape_cast %191 : vector<16x128xf32> to vector<2x8x128xf32>
    %c7 = arith.constant 7 : index
    %c0_97 = arith.constant 0 : index
    %c0_98 = arith.constant 0 : index
    %193 = vector.load %arg4[%c7, %c0_97, %c0_98] : memref<15x8x128xf32, #tpu.memory_space<vmem>>, vector<1x8x128xf32>
    %194 = vector.shape_cast %193 : vector<1x8x128xf32> to vector<8x128xf32>
    %cst_99 = arith.constant dense<0.000000e+00> : vector<8x128xf32>
    %195 = vector.multi_reduction <add>, %192, %cst_99 [0] : vector<2x8x128xf32> to vector<8x128xf32>
    %196 = arith.addf %194, %195 : vector<8x128xf32>
    %c7_100 = arith.constant 7 : index
    %c0_101 = arith.constant 0 : index
    %c0_102 = arith.constant 0 : index
    %197 = vector.load %arg4[%c7_100, %c0_101, %c0_102] : memref<15x8x128xf32, #tpu.memory_space<vmem>>, vector<1x8x128xf32>
    %198 = vector.shape_cast %197 : vector<1x8x128xf32> to vector<8x128xf32>
    %199 = vector.shape_cast %196 : vector<8x128xf32> to vector<1x8x128xf32>
    tpu.vector_store %arg4[%c7_100, %c0_101, %c0_102], %199 {strides = array<i32>} : memref<15x8x128xf32, #tpu.memory_space<vmem>>, vector<1x8x128xf32>,
    %200 = vector.extract_strided_slice %4 {offsets = [1, 0, 0], sizes = [1, 16, 128], strides = [1, 1, 1]} : vector<6x16x128xf32> to vector<1x16x128xf32>
    %201 = vector.shape_cast %200 : vector<1x16x128xf32> to vector<16x128xf32>
    %202 = vector.extract_strided_slice %4 {offsets = [4, 0, 0], sizes = [1, 16, 128], strides = [1, 1, 1]} : vector<6x16x128xf32> to vector<1x16x128xf32>
    %203 = vector.shape_cast %202 : vector<1x16x128xf32> to vector<16x128xf32>
    %204 = arith.mulf %201, %203 : vector<16x128xf32>
    %205 = vector.shape_cast %204 : vector<16x128xf32> to vector<2x8x128xf32>
    %c7_103 = arith.constant 7 : index
    %c0_104 = arith.constant 0 : index
    %c0_105 = arith.constant 0 : index
    %206 = vector.load %arg5[%c7_103, %c0_104, %c0_105] : memref<15x8x128xf32, #tpu.memory_space<vmem>>, vector<1x8x128xf32>
    %207 = vector.shape_cast %206 : vector<1x8x128xf32> to vector<8x128xf32>
    %cst_106 = arith.constant dense<0.000000e+00> : vector<8x128xf32>
    %208 = vector.multi_reduction <add>, %205, %cst_106 [0] : vector<2x8x128xf32> to vector<8x128xf32>
    %209 = arith.addf %207, %208 : vector<8x128xf32>
    %c7_107 = arith.constant 7 : index
    %c0_108 = arith.constant 0 : index
    %c0_109 = arith.constant 0 : index
    %210 = vector.load %arg5[%c7_107, %c0_108, %c0_109] : memref<15x8x128xf32, #tpu.memory_space<vmem>>, vector<1x8x128xf32>
    %211 = vector.shape_cast %210 : vector<1x8x128xf32> to vector<8x128xf32>
    %212 = vector.shape_cast %209 : vector<8x128xf32> to vector<1x8x128xf32>
    tpu.vector_store %arg5[%c7_107, %c0_108, %c0_109], %212 {strides = array<i32>} : memref<15x8x128xf32, #tpu.memory_space<vmem>>, vector<1x8x128xf32>,
    %213 = vector.extract_strided_slice %3 {offsets = [1, 0, 0], sizes = [1, 16, 128], strides = [1, 1, 1]} : vector<6x16x128xf32> to vector<1x16x128xf32>
    %214 = vector.shape_cast %213 : vector<1x16x128xf32> to vector<16x128xf32>
    %215 = vector.extract_strided_slice %3 {offsets = [5, 0, 0], sizes = [1, 16, 128], strides = [1, 1, 1]} : vector<6x16x128xf32> to vector<1x16x128xf32>
    %216 = vector.shape_cast %215 : vector<1x16x128xf32> to vector<16x128xf32>
    %217 = arith.mulf %214, %216 : vector<16x128xf32>
    %218 = vector.shape_cast %217 : vector<16x128xf32> to vector<2x8x128xf32>
    %c8 = arith.constant 8 : index
    %c0_110 = arith.constant 0 : index
    %c0_111 = arith.constant 0 : index
    %219 = vector.load %arg4[%c8, %c0_110, %c0_111] : memref<15x8x128xf32, #tpu.memory_space<vmem>>, vector<1x8x128xf32>
    %220 = vector.shape_cast %219 : vector<1x8x128xf32> to vector<8x128xf32>
    %cst_112 = arith.constant dense<0.000000e+00> : vector<8x128xf32>
    %221 = vector.multi_reduction <add>, %218, %cst_112 [0] : vector<2x8x128xf32> to vector<8x128xf32>
    %222 = arith.addf %220, %221 : vector<8x128xf32>
    %c8_113 = arith.constant 8 : index
    %c0_114 = arith.constant 0 : index
    %c0_115 = arith.constant 0 : index
    %223 = vector.load %arg4[%c8_113, %c0_114, %c0_115] : memref<15x8x128xf32, #tpu.memory_space<vmem>>, vector<1x8x128xf32>
    %224 = vector.shape_cast %223 : vector<1x8x128xf32> to vector<8x128xf32>
    %225 = vector.shape_cast %222 : vector<8x128xf32> to vector<1x8x128xf32>
    tpu.vector_store %arg4[%c8_113, %c0_114, %c0_115], %225 {strides = array<i32>} : memref<15x8x128xf32, #tpu.memory_space<vmem>>, vector<1x8x128xf32>,
    %226 = vector.extract_strided_slice %4 {offsets = [1, 0, 0], sizes = [1, 16, 128], strides = [1, 1, 1]} : vector<6x16x128xf32> to vector<1x16x128xf32>
    %227 = vector.shape_cast %226 : vector<1x16x128xf32> to vector<16x128xf32>
    %228 = vector.extract_strided_slice %4 {offsets = [5, 0, 0], sizes = [1, 16, 128], strides = [1, 1, 1]} : vector<6x16x128xf32> to vector<1x16x128xf32>
    %229 = vector.shape_cast %228 : vector<1x16x128xf32> to vector<16x128xf32>
    %230 = arith.mulf %227, %229 : vector<16x128xf32>
    %231 = vector.shape_cast %230 : vector<16x128xf32> to vector<2x8x128xf32>
    %c8_116 = arith.constant 8 : index
    %c0_117 = arith.constant 0 : index
    %c0_118 = arith.constant 0 : index
    %232 = vector.load %arg5[%c8_116, %c0_117, %c0_118] : memref<15x8x128xf32, #tpu.memory_space<vmem>>, vector<1x8x128xf32>
    %233 = vector.shape_cast %232 : vector<1x8x128xf32> to vector<8x128xf32>
    %cst_119 = arith.constant dense<0.000000e+00> : vector<8x128xf32>
    %234 = vector.multi_reduction <add>, %231, %cst_119 [0] : vector<2x8x128xf32> to vector<8x128xf32>
    %235 = arith.addf %233, %234 : vector<8x128xf32>
    %c8_120 = arith.constant 8 : index
    %c0_121 = arith.constant 0 : index
    %c0_122 = arith.constant 0 : index
    %236 = vector.load %arg5[%c8_120, %c0_121, %c0_122] : memref<15x8x128xf32, #tpu.memory_space<vmem>>, vector<1x8x128xf32>
    %237 = vector.shape_cast %236 : vector<1x8x128xf32> to vector<8x128xf32>
    %238 = vector.shape_cast %235 : vector<8x128xf32> to vector<1x8x128xf32>
    tpu.vector_store %arg5[%c8_120, %c0_121, %c0_122], %238 {strides = array<i32>} : memref<15x8x128xf32, #tpu.memory_space<vmem>>, vector<1x8x128xf32>,
    %239 = vector.extract_strided_slice %3 {offsets = [2, 0, 0], sizes = [1, 16, 128], strides = [1, 1, 1]} : vector<6x16x128xf32> to vector<1x16x128xf32>
    %240 = vector.shape_cast %239 : vector<1x16x128xf32> to vector<16x128xf32>
    %241 = vector.extract_strided_slice %3 {offsets = [3, 0, 0], sizes = [1, 16, 128], strides = [1, 1, 1]} : vector<6x16x128xf32> to vector<1x16x128xf32>
    %242 = vector.shape_cast %241 : vector<1x16x128xf32> to vector<16x128xf32>
    %243 = arith.mulf %240, %242 : vector<16x128xf32>
    %244 = vector.shape_cast %243 : vector<16x128xf32> to vector<2x8x128xf32>
    %c9 = arith.constant 9 : index
    %c0_123 = arith.constant 0 : index
    %c0_124 = arith.constant 0 : index
    %245 = vector.load %arg4[%c9, %c0_123, %c0_124] : memref<15x8x128xf32, #tpu.memory_space<vmem>>, vector<1x8x128xf32>
    %246 = vector.shape_cast %245 : vector<1x8x128xf32> to vector<8x128xf32>
    %cst_125 = arith.constant dense<0.000000e+00> : vector<8x128xf32>
    %247 = vector.multi_reduction <add>, %244, %cst_125 [0] : vector<2x8x128xf32> to vector<8x128xf32>
    %248 = arith.addf %246, %247 : vector<8x128xf32>
    %c9_126 = arith.constant 9 : index
    %c0_127 = arith.constant 0 : index
    %c0_128 = arith.constant 0 : index
    %249 = vector.load %arg4[%c9_126, %c0_127, %c0_128] : memref<15x8x128xf32, #tpu.memory_space<vmem>>, vector<1x8x128xf32>
    %250 = vector.shape_cast %249 : vector<1x8x128xf32> to vector<8x128xf32>
    %251 = vector.shape_cast %248 : vector<8x128xf32> to vector<1x8x128xf32>
    tpu.vector_store %arg4[%c9_126, %c0_127, %c0_128], %251 {strides = array<i32>} : memref<15x8x128xf32, #tpu.memory_space<vmem>>, vector<1x8x128xf32>,
    %252 = vector.extract_strided_slice %4 {offsets = [2, 0, 0], sizes = [1, 16, 128], strides = [1, 1, 1]} : vector<6x16x128xf32> to vector<1x16x128xf32>
    %253 = vector.shape_cast %252 : vector<1x16x128xf32> to vector<16x128xf32>
    %254 = vector.extract_strided_slice %4 {offsets = [3, 0, 0], sizes = [1, 16, 128], strides = [1, 1, 1]} : vector<6x16x128xf32> to vector<1x16x128xf32>
    %255 = vector.shape_cast %254 : vector<1x16x128xf32> to vector<16x128xf32>
    %256 = arith.mulf %253, %255 : vector<16x128xf32>
    %257 = vector.shape_cast %256 : vector<16x128xf32> to vector<2x8x128xf32>
    %c9_129 = arith.constant 9 : index
    %c0_130 = arith.constant 0 : index
    %c0_131 = arith.constant 0 : index
    %258 = vector.load %arg5[%c9_129, %c0_130, %c0_131] : memref<15x8x128xf32, #tpu.memory_space<vmem>>, vector<1x8x128xf32>
    %259 = vector.shape_cast %258 : vector<1x8x128xf32> to vector<8x128xf32>
    %cst_132 = arith.constant dense<0.000000e+00> : vector<8x128xf32>
    %260 = vector.multi_reduction <add>, %257, %cst_132 [0] : vector<2x8x128xf32> to vector<8x128xf32>
    %261 = arith.addf %259, %260 : vector<8x128xf32>
    %c9_133 = arith.constant 9 : index
    %c0_134 = arith.constant 0 : index
    %c0_135 = arith.constant 0 : index
    %262 = vector.load %arg5[%c9_133, %c0_134, %c0_135] : memref<15x8x128xf32, #tpu.memory_space<vmem>>, vector<1x8x128xf32>
    %263 = vector.shape_cast %262 : vector<1x8x128xf32> to vector<8x128xf32>
    %264 = vector.shape_cast %261 : vector<8x128xf32> to vector<1x8x128xf32>
    tpu.vector_store %arg5[%c9_133, %c0_134, %c0_135], %264 {strides = array<i32>} : memref<15x8x128xf32, #tpu.memory_space<vmem>>, vector<1x8x128xf32>,
    %265 = vector.extract_strided_slice %3 {offsets = [2, 0, 0], sizes = [1, 16, 128], strides = [1, 1, 1]} : vector<6x16x128xf32> to vector<1x16x128xf32>
    %266 = vector.shape_cast %265 : vector<1x16x128xf32> to vector<16x128xf32>
    %267 = vector.extract_strided_slice %3 {offsets = [4, 0, 0], sizes = [1, 16, 128], strides = [1, 1, 1]} : vector<6x16x128xf32> to vector<1x16x128xf32>
    %268 = vector.shape_cast %267 : vector<1x16x128xf32> to vector<16x128xf32>
    %269 = arith.mulf %266, %268 : vector<16x128xf32>
    %270 = vector.shape_cast %269 : vector<16x128xf32> to vector<2x8x128xf32>
    %c10 = arith.constant 10 : index
    %c0_136 = arith.constant 0 : index
    %c0_137 = arith.constant 0 : index
    %271 = vector.load %arg4[%c10, %c0_136, %c0_137] : memref<15x8x128xf32, #tpu.memory_space<vmem>>, vector<1x8x128xf32>
    %272 = vector.shape_cast %271 : vector<1x8x128xf32> to vector<8x128xf32>
    %cst_138 = arith.constant dense<0.000000e+00> : vector<8x128xf32>
    %273 = vector.multi_reduction <add>, %270, %cst_138 [0] : vector<2x8x128xf32> to vector<8x128xf32>
    %274 = arith.addf %272, %273 : vector<8x128xf32>
    %c10_139 = arith.constant 10 : index
    %c0_140 = arith.constant 0 : index
    %c0_141 = arith.constant 0 : index
    %275 = vector.load %arg4[%c10_139, %c0_140, %c0_141] : memref<15x8x128xf32, #tpu.memory_space<vmem>>, vector<1x8x128xf32>
    %276 = vector.shape_cast %275 : vector<1x8x128xf32> to vector<8x128xf32>
    %277 = vector.shape_cast %274 : vector<8x128xf32> to vector<1x8x128xf32>
    tpu.vector_store %arg4[%c10_139, %c0_140, %c0_141], %277 {strides = array<i32>} : memref<15x8x128xf32, #tpu.memory_space<vmem>>, vector<1x8x128xf32>,
    %278 = vector.extract_strided_slice %4 {offsets = [2, 0, 0], sizes = [1, 16, 128], strides = [1, 1, 1]} : vector<6x16x128xf32> to vector<1x16x128xf32>
    %279 = vector.shape_cast %278 : vector<1x16x128xf32> to vector<16x128xf32>
    %280 = vector.extract_strided_slice %4 {offsets = [4, 0, 0], sizes = [1, 16, 128], strides = [1, 1, 1]} : vector<6x16x128xf32> to vector<1x16x128xf32>
    %281 = vector.shape_cast %280 : vector<1x16x128xf32> to vector<16x128xf32>
    %282 = arith.mulf %279, %281 : vector<16x128xf32>
    %283 = vector.shape_cast %282 : vector<16x128xf32> to vector<2x8x128xf32>
    %c10_142 = arith.constant 10 : index
    %c0_143 = arith.constant 0 : index
    %c0_144 = arith.constant 0 : index
    %284 = vector.load %arg5[%c10_142, %c0_143, %c0_144] : memref<15x8x128xf32, #tpu.memory_space<vmem>>, vector<1x8x128xf32>
    %285 = vector.shape_cast %284 : vector<1x8x128xf32> to vector<8x128xf32>
    %cst_145 = arith.constant dense<0.000000e+00> : vector<8x128xf32>
    %286 = vector.multi_reduction <add>, %283, %cst_145 [0] : vector<2x8x128xf32> to vector<8x128xf32>
    %287 = arith.addf %285, %286 : vector<8x128xf32>
    %c10_146 = arith.constant 10 : index
    %c0_147 = arith.constant 0 : index
    %c0_148 = arith.constant 0 : index
    %288 = vector.load %arg5[%c10_146, %c0_147, %c0_148] : memref<15x8x128xf32, #tpu.memory_space<vmem>>, vector<1x8x128xf32>
    %289 = vector.shape_cast %288 : vector<1x8x128xf32> to vector<8x128xf32>
    %290 = vector.shape_cast %287 : vector<8x128xf32> to vector<1x8x128xf32>
    tpu.vector_store %arg5[%c10_146, %c0_147, %c0_148], %290 {strides = array<i32>} : memref<15x8x128xf32, #tpu.memory_space<vmem>>, vector<1x8x128xf32>,
    %291 = vector.extract_strided_slice %3 {offsets = [2, 0, 0], sizes = [1, 16, 128], strides = [1, 1, 1]} : vector<6x16x128xf32> to vector<1x16x128xf32>
    %292 = vector.shape_cast %291 : vector<1x16x128xf32> to vector<16x128xf32>
    %293 = vector.extract_strided_slice %3 {offsets = [5, 0, 0], sizes = [1, 16, 128], strides = [1, 1, 1]} : vector<6x16x128xf32> to vector<1x16x128xf32>
    %294 = vector.shape_cast %293 : vector<1x16x128xf32> to vector<16x128xf32>
    %295 = arith.mulf %292, %294 : vector<16x128xf32>
    %296 = vector.shape_cast %295 : vector<16x128xf32> to vector<2x8x128xf32>
    %c11 = arith.constant 11 : index
    %c0_149 = arith.constant 0 : index
    %c0_150 = arith.constant 0 : index
    %297 = vector.load %arg4[%c11, %c0_149, %c0_150] : memref<15x8x128xf32, #tpu.memory_space<vmem>>, vector<1x8x128xf32>
    %298 = vector.shape_cast %297 : vector<1x8x128xf32> to vector<8x128xf32>
    %cst_151 = arith.constant dense<0.000000e+00> : vector<8x128xf32>
    %299 = vector.multi_reduction <add>, %296, %cst_151 [0] : vector<2x8x128xf32> to vector<8x128xf32>
    %300 = arith.addf %298, %299 : vector<8x128xf32>
    %c11_152 = arith.constant 11 : index
    %c0_153 = arith.constant 0 : index
    %c0_154 = arith.constant 0 : index
    %301 = vector.load %arg4[%c11_152, %c0_153, %c0_154] : memref<15x8x128xf32, #tpu.memory_space<vmem>>, vector<1x8x128xf32>
    %302 = vector.shape_cast %301 : vector<1x8x128xf32> to vector<8x128xf32>
    %303 = vector.shape_cast %300 : vector<8x128xf32> to vector<1x8x128xf32>
    tpu.vector_store %arg4[%c11_152, %c0_153, %c0_154], %303 {strides = array<i32>} : memref<15x8x128xf32, #tpu.memory_space<vmem>>, vector<1x8x128xf32>,
    %304 = vector.extract_strided_slice %4 {offsets = [2, 0, 0], sizes = [1, 16, 128], strides = [1, 1, 1]} : vector<6x16x128xf32> to vector<1x16x128xf32>
    %305 = vector.shape_cast %304 : vector<1x16x128xf32> to vector<16x128xf32>
    %306 = vector.extract_strided_slice %4 {offsets = [5, 0, 0], sizes = [1, 16, 128], strides = [1, 1, 1]} : vector<6x16x128xf32> to vector<1x16x128xf32>
    %307 = vector.shape_cast %306 : vector<1x16x128xf32> to vector<16x128xf32>
    %308 = arith.mulf %305, %307 : vector<16x128xf32>
    %309 = vector.shape_cast %308 : vector<16x128xf32> to vector<2x8x128xf32>
    %c11_155 = arith.constant 11 : index
    %c0_156 = arith.constant 0 : index
    %c0_157 = arith.constant 0 : index
    %310 = vector.load %arg5[%c11_155, %c0_156, %c0_157] : memref<15x8x128xf32, #tpu.memory_space<vmem>>, vector<1x8x128xf32>
    %311 = vector.shape_cast %310 : vector<1x8x128xf32> to vector<8x128xf32>
    %cst_158 = arith.constant dense<0.000000e+00> : vector<8x128xf32>
    %312 = vector.multi_reduction <add>, %309, %cst_158 [0] : vector<2x8x128xf32> to vector<8x128xf32>
    %313 = arith.addf %311, %312 : vector<8x128xf32>
    %c11_159 = arith.constant 11 : index
    %c0_160 = arith.constant 0 : index
    %c0_161 = arith.constant 0 : index
    %314 = vector.load %arg5[%c11_159, %c0_160, %c0_161] : memref<15x8x128xf32, #tpu.memory_space<vmem>>, vector<1x8x128xf32>
    %315 = vector.shape_cast %314 : vector<1x8x128xf32> to vector<8x128xf32>
    %316 = vector.shape_cast %313 : vector<8x128xf32> to vector<1x8x128xf32>
    tpu.vector_store %arg5[%c11_159, %c0_160, %c0_161], %316 {strides = array<i32>} : memref<15x8x128xf32, #tpu.memory_space<vmem>>, vector<1x8x128xf32>,
    %317 = vector.extract_strided_slice %3 {offsets = [3, 0, 0], sizes = [1, 16, 128], strides = [1, 1, 1]} : vector<6x16x128xf32> to vector<1x16x128xf32>
    %318 = vector.shape_cast %317 : vector<1x16x128xf32> to vector<16x128xf32>
    %319 = vector.extract_strided_slice %3 {offsets = [4, 0, 0], sizes = [1, 16, 128], strides = [1, 1, 1]} : vector<6x16x128xf32> to vector<1x16x128xf32>
    %320 = vector.shape_cast %319 : vector<1x16x128xf32> to vector<16x128xf32>
    %321 = arith.mulf %318, %320 : vector<16x128xf32>
    %322 = vector.shape_cast %321 : vector<16x128xf32> to vector<2x8x128xf32>
    %c12 = arith.constant 12 : index
    %c0_162 = arith.constant 0 : index
    %c0_163 = arith.constant 0 : index
    %323 = vector.load %arg4[%c12, %c0_162, %c0_163] : memref<15x8x128xf32, #tpu.memory_space<vmem>>, vector<1x8x128xf32>
    %324 = vector.shape_cast %323 : vector<1x8x128xf32> to vector<8x128xf32>
    %cst_164 = arith.constant dense<0.000000e+00> : vector<8x128xf32>
    %325 = vector.multi_reduction <add>, %322, %cst_164 [0] : vector<2x8x128xf32> to vector<8x128xf32>
    %326 = arith.addf %324, %325 : vector<8x128xf32>
    %c12_165 = arith.constant 12 : index
    %c0_166 = arith.constant 0 : index
    %c0_167 = arith.constant 0 : index
    %327 = vector.load %arg4[%c12_165, %c0_166, %c0_167] : memref<15x8x128xf32, #tpu.memory_space<vmem>>, vector<1x8x128xf32>
    %328 = vector.shape_cast %327 : vector<1x8x128xf32> to vector<8x128xf32>
    %329 = vector.shape_cast %326 : vector<8x128xf32> to vector<1x8x128xf32>
    tpu.vector_store %arg4[%c12_165, %c0_166, %c0_167], %329 {strides = array<i32>} : memref<15x8x128xf32, #tpu.memory_space<vmem>>, vector<1x8x128xf32>,
    %330 = vector.extract_strided_slice %4 {offsets = [3, 0, 0], sizes = [1, 16, 128], strides = [1, 1, 1]} : vector<6x16x128xf32> to vector<1x16x128xf32>
    %331 = vector.shape_cast %330 : vector<1x16x128xf32> to vector<16x128xf32>
    %332 = vector.extract_strided_slice %4 {offsets = [4, 0, 0], sizes = [1, 16, 128], strides = [1, 1, 1]} : vector<6x16x128xf32> to vector<1x16x128xf32>
    %333 = vector.shape_cast %332 : vector<1x16x128xf32> to vector<16x128xf32>
    %334 = arith.mulf %331, %333 : vector<16x128xf32>
    %335 = vector.shape_cast %334 : vector<16x128xf32> to vector<2x8x128xf32>
    %c12_168 = arith.constant 12 : index
    %c0_169 = arith.constant 0 : index
    %c0_170 = arith.constant 0 : index
    %336 = vector.load %arg5[%c12_168, %c0_169, %c0_170] : memref<15x8x128xf32, #tpu.memory_space<vmem>>, vector<1x8x128xf32>
    %337 = vector.shape_cast %336 : vector<1x8x128xf32> to vector<8x128xf32>
    %cst_171 = arith.constant dense<0.000000e+00> : vector<8x128xf32>
    %338 = vector.multi_reduction <add>, %335, %cst_171 [0] : vector<2x8x128xf32> to vector<8x128xf32>
    %339 = arith.addf %337, %338 : vector<8x128xf32>
    %c12_172 = arith.constant 12 : index
    %c0_173 = arith.constant 0 : index
    %c0_174 = arith.constant 0 : index
    %340 = vector.load %arg5[%c12_172, %c0_173, %c0_174] : memref<15x8x128xf32, #tpu.memory_space<vmem>>, vector<1x8x128xf32>
    %341 = vector.shape_cast %340 : vector<1x8x128xf32> to vector<8x128xf32>
    %342 = vector.shape_cast %339 : vector<8x128xf32> to vector<1x8x128xf32>
    tpu.vector_store %arg5[%c12_172, %c0_173, %c0_174], %342 {strides = array<i32>} : memref<15x8x128xf32, #tpu.memory_space<vmem>>, vector<1x8x128xf32>,
    %343 = vector.extract_strided_slice %3 {offsets = [3, 0, 0], sizes = [1, 16, 128], strides = [1, 1, 1]} : vector<6x16x128xf32> to vector<1x16x128xf32>
    %344 = vector.shape_cast %343 : vector<1x16x128xf32> to vector<16x128xf32>
    %345 = vector.extract_strided_slice %3 {offsets = [5, 0, 0], sizes = [1, 16, 128], strides = [1, 1, 1]} : vector<6x16x128xf32> to vector<1x16x128xf32>
    %346 = vector.shape_cast %345 : vector<1x16x128xf32> to vector<16x128xf32>
    %347 = arith.mulf %344, %346 : vector<16x128xf32>
    %348 = vector.shape_cast %347 : vector<16x128xf32> to vector<2x8x128xf32>
    %c13 = arith.constant 13 : index
    %c0_175 = arith.constant 0 : index
    %c0_176 = arith.constant 0 : index
    %349 = vector.load %arg4[%c13, %c0_175, %c0_176] : memref<15x8x128xf32, #tpu.memory_space<vmem>>, vector<1x8x128xf32>
    %350 = vector.shape_cast %349 : vector<1x8x128xf32> to vector<8x128xf32>
    %cst_177 = arith.constant dense<0.000000e+00> : vector<8x128xf32>
    %351 = vector.multi_reduction <add>, %348, %cst_177 [0] : vector<2x8x128xf32> to vector<8x128xf32>
    %352 = arith.addf %350, %351 : vector<8x128xf32>
    %c13_178 = arith.constant 13 : index
    %c0_179 = arith.constant 0 : index
    %c0_180 = arith.constant 0 : index
    %353 = vector.load %arg4[%c13_178, %c0_179, %c0_180] : memref<15x8x128xf32, #tpu.memory_space<vmem>>, vector<1x8x128xf32>
    %354 = vector.shape_cast %353 : vector<1x8x128xf32> to vector<8x128xf32>
    %355 = vector.shape_cast %352 : vector<8x128xf32> to vector<1x8x128xf32>
    tpu.vector_store %arg4[%c13_178, %c0_179, %c0_180], %355 {strides = array<i32>} : memref<15x8x128xf32, #tpu.memory_space<vmem>>, vector<1x8x128xf32>,
    %356 = vector.extract_strided_slice %4 {offsets = [3, 0, 0], sizes = [1, 16, 128], strides = [1, 1, 1]} : vector<6x16x128xf32> to vector<1x16x128xf32>
    %357 = vector.shape_cast %356 : vector<1x16x128xf32> to vector<16x128xf32>
    %358 = vector.extract_strided_slice %4 {offsets = [5, 0, 0], sizes = [1, 16, 128], strides = [1, 1, 1]} : vector<6x16x128xf32> to vector<1x16x128xf32>
    %359 = vector.shape_cast %358 : vector<1x16x128xf32> to vector<16x128xf32>
    %360 = arith.mulf %357, %359 : vector<16x128xf32>
    %361 = vector.shape_cast %360 : vector<16x128xf32> to vector<2x8x128xf32>
    %c13_181 = arith.constant 13 : index
    %c0_182 = arith.constant 0 : index
    %c0_183 = arith.constant 0 : index
    %362 = vector.load %arg5[%c13_181, %c0_182, %c0_183] : memref<15x8x128xf32, #tpu.memory_space<vmem>>, vector<1x8x128xf32>
    %363 = vector.shape_cast %362 : vector<1x8x128xf32> to vector<8x128xf32>
    %cst_184 = arith.constant dense<0.000000e+00> : vector<8x128xf32>
    %364 = vector.multi_reduction <add>, %361, %cst_184 [0] : vector<2x8x128xf32> to vector<8x128xf32>
    %365 = arith.addf %363, %364 : vector<8x128xf32>
    %c13_185 = arith.constant 13 : index
    %c0_186 = arith.constant 0 : index
    %c0_187 = arith.constant 0 : index
    %366 = vector.load %arg5[%c13_185, %c0_186, %c0_187] : memref<15x8x128xf32, #tpu.memory_space<vmem>>, vector<1x8x128xf32>
    %367 = vector.shape_cast %366 : vector<1x8x128xf32> to vector<8x128xf32>
    %368 = vector.shape_cast %365 : vector<8x128xf32> to vector<1x8x128xf32>
    tpu.vector_store %arg5[%c13_185, %c0_186, %c0_187], %368 {strides = array<i32>} : memref<15x8x128xf32, #tpu.memory_space<vmem>>, vector<1x8x128xf32>,
    %369 = vector.extract_strided_slice %3 {offsets = [4, 0, 0], sizes = [1, 16, 128], strides = [1, 1, 1]} : vector<6x16x128xf32> to vector<1x16x128xf32>
    %370 = vector.shape_cast %369 : vector<1x16x128xf32> to vector<16x128xf32>
    %371 = vector.extract_strided_slice %3 {offsets = [5, 0, 0], sizes = [1, 16, 128], strides = [1, 1, 1]} : vector<6x16x128xf32> to vector<1x16x128xf32>
    %372 = vector.shape_cast %371 : vector<1x16x128xf32> to vector<16x128xf32>
    %373 = arith.mulf %370, %372 : vector<16x128xf32>
    %374 = vector.shape_cast %373 : vector<16x128xf32> to vector<2x8x128xf32>
    %c14 = arith.constant 14 : index
    %c0_188 = arith.constant 0 : index
    %c0_189 = arith.constant 0 : index
    %375 = vector.load %arg4[%c14, %c0_188, %c0_189] : memref<15x8x128xf32, #tpu.memory_space<vmem>>, vector<1x8x128xf32>
    %376 = vector.shape_cast %375 : vector<1x8x128xf32> to vector<8x128xf32>
    %cst_190 = arith.constant dense<0.000000e+00> : vector<8x128xf32>
    %377 = vector.multi_reduction <add>, %374, %cst_190 [0] : vector<2x8x128xf32> to vector<8x128xf32>
    %378 = arith.addf %376, %377 : vector<8x128xf32>
    %c14_191 = arith.constant 14 : index
    %c0_192 = arith.constant 0 : index
    %c0_193 = arith.constant 0 : index
    %379 = vector.load %arg4[%c14_191, %c0_192, %c0_193] : memref<15x8x128xf32, #tpu.memory_space<vmem>>, vector<1x8x128xf32>
    %380 = vector.shape_cast %379 : vector<1x8x128xf32> to vector<8x128xf32>
    %381 = vector.shape_cast %378 : vector<8x128xf32> to vector<1x8x128xf32>
    tpu.vector_store %arg4[%c14_191, %c0_192, %c0_193], %381 {strides = array<i32>} : memref<15x8x128xf32, #tpu.memory_space<vmem>>, vector<1x8x128xf32>,
    %382 = vector.extract_strided_slice %4 {offsets = [4, 0, 0], sizes = [1, 16, 128], strides = [1, 1, 1]} : vector<6x16x128xf32> to vector<1x16x128xf32>
    %383 = vector.shape_cast %382 : vector<1x16x128xf32> to vector<16x128xf32>
    %384 = vector.extract_strided_slice %4 {offsets = [5, 0, 0], sizes = [1, 16, 128], strides = [1, 1, 1]} : vector<6x16x128xf32> to vector<1x16x128xf32>
    %385 = vector.shape_cast %384 : vector<1x16x128xf32> to vector<16x128xf32>
    %386 = arith.mulf %383, %385 : vector<16x128xf32>
    %387 = vector.shape_cast %386 : vector<16x128xf32> to vector<2x8x128xf32>
    %c14_194 = arith.constant 14 : index
    %c0_195 = arith.constant 0 : index
    %c0_196 = arith.constant 0 : index
    %388 = vector.load %arg5[%c14_194, %c0_195, %c0_196] : memref<15x8x128xf32, #tpu.memory_space<vmem>>, vector<1x8x128xf32>
    %389 = vector.shape_cast %388 : vector<1x8x128xf32> to vector<8x128xf32>
    %cst_197 = arith.constant dense<0.000000e+00> : vector<8x128xf32>
    %390 = vector.multi_reduction <add>, %387, %cst_197 [0] : vector<2x8x128xf32> to vector<8x128xf32>
    %391 = arith.addf %389, %390 : vector<8x128xf32>
    %c14_198 = arith.constant 14 : index
    %c0_199 = arith.constant 0 : index
    %c0_200 = arith.constant 0 : index
    %392 = vector.load %arg5[%c14_198, %c0_199, %c0_200] : memref<15x8x128xf32, #tpu.memory_space<vmem>>, vector<1x8x128xf32>
    %393 = vector.shape_cast %392 : vector<1x8x128xf32> to vector<8x128xf32>
    %394 = vector.shape_cast %391 : vector<8x128xf32> to vector<1x8x128xf32>
    tpu.vector_store %arg5[%c14_198, %c0_199, %c0_200], %394 {strides = array<i32>} : memref<15x8x128xf32, #tpu.memory_space<vmem>>, vector<1x8x128xf32>,
    %c0_i32_201 = arith.constant 0 : i32
    %395 = arith.cmpi eq, %arg0, %c0_i32_201 : i32
    %396 = arith.extui %395 : i1 to i32
    %c0_i32_202 = arith.constant 0 : i32
    %397 = arith.cmpi ne, %396, %c0_i32_202 : i32
    scf.if %397 {
      %c0_203 = arith.constant 0 : index
      %c0_204 = arith.constant 0 : index
      %c0_205 = arith.constant 0 : index
      %398 = vector.load %arg5[%c0_203, %c0_204, %c0_205] : memref<15x8x128xf32, #tpu.memory_space<vmem>>, vector<1x8x128xf32>
      %399 = vector.shape_cast %398 : vector<1x8x128xf32> to vector<8x128xf32>
      %c0_206 = arith.constant 0 : index
      %c0_207 = arith.constant 0 : index
      %c0_208 = arith.constant 0 : index
      %400 = vector.load %arg4[%c0_206, %c0_207, %c0_208] : memref<15x8x128xf32, #tpu.memory_space<vmem>>, vector<1x8x128xf32>
      %401 = vector.shape_cast %400 : vector<1x8x128xf32> to vector<8x128xf32>
      %402 = arith.subf %399, %401 : vector<8x128xf32>
      %403 = vector.shape_cast %402 : vector<8x128xf32> to vector<1x8x128xf32>
      %cst_209 = arith.constant dense<0.000000e+00> : vector<1xf32>
      %404 = vector.multi_reduction <add>, %403, %cst_209 [1, 2] : vector<1x8x128xf32> to vector<1xf32>
      %405 = vector.shape_cast %404 : vector<1xf32> to vector<1x1x1xf32>
      %406 = vector.extract %405[0, 0, 0] : f32 from vector<1x1x1xf32>
      %cst_210 = arith.constant 4.8828125E-4 : f32
      %407 = arith.mulf %406, %cst_210 : f32
      %408 = arith.mulf %407, %407 : f32
      %cst_211 = arith.constant 0.000000e+00 : f32
      %409 = arith.addf %cst_211, %408 : f32
      %c1_212 = arith.constant 1 : index
      %c0_213 = arith.constant 0 : index
      %c0_214 = arith.constant 0 : index
      %410 = vector.load %arg5[%c1_212, %c0_213, %c0_214] : memref<15x8x128xf32, #tpu.memory_space<vmem>>, vector<1x8x128xf32>
      %411 = vector.shape_cast %410 : vector<1x8x128xf32> to vector<8x128xf32>
      %c1_215 = arith.constant 1 : index
      %c0_216 = arith.constant 0 : index
      %c0_217 = arith.constant 0 : index
      %412 = vector.load %arg4[%c1_215, %c0_216, %c0_217] : memref<15x8x128xf32, #tpu.memory_space<vmem>>, vector<1x8x128xf32>
      %413 = vector.shape_cast %412 : vector<1x8x128xf32> to vector<8x128xf32>
      %414 = arith.subf %411, %413 : vector<8x128xf32>
      %415 = vector.shape_cast %414 : vector<8x128xf32> to vector<1x8x128xf32>
      %cst_218 = arith.constant dense<0.000000e+00> : vector<1xf32>
      %416 = vector.multi_reduction <add>, %415, %cst_218 [1, 2] : vector<1x8x128xf32> to vector<1xf32>
      %417 = vector.shape_cast %416 : vector<1xf32> to vector<1x1x1xf32>
      %418 = vector.extract %417[0, 0, 0] : f32 from vector<1x1x1xf32>
      %cst_219 = arith.constant 4.8828125E-4 : f32
      %419 = arith.mulf %418, %cst_219 : f32
      %420 = arith.mulf %419, %419 : f32
      %421 = arith.addf %409, %420 : f32
      %c2_220 = arith.constant 2 : index
      %c0_221 = arith.constant 0 : index
      %c0_222 = arith.constant 0 : index
      %422 = vector.load %arg5[%c2_220, %c0_221, %c0_222] : memref<15x8x128xf32, #tpu.memory_space<vmem>>, vector<1x8x128xf32>
      %423 = vector.shape_cast %422 : vector<1x8x128xf32> to vector<8x128xf32>
      %c2_223 = arith.constant 2 : index
      %c0_224 = arith.constant 0 : index
      %c0_225 = arith.constant 0 : index
      %424 = vector.load %arg4[%c2_223, %c0_224, %c0_225] : memref<15x8x128xf32, #tpu.memory_space<vmem>>, vector<1x8x128xf32>
      %425 = vector.shape_cast %424 : vector<1x8x128xf32> to vector<8x128xf32>
      %426 = arith.subf %423, %425 : vector<8x128xf32>
      %427 = vector.shape_cast %426 : vector<8x128xf32> to vector<1x8x128xf32>
      %cst_226 = arith.constant dense<0.000000e+00> : vector<1xf32>
      %428 = vector.multi_reduction <add>, %427, %cst_226 [1, 2] : vector<1x8x128xf32> to vector<1xf32>
      %429 = vector.shape_cast %428 : vector<1xf32> to vector<1x1x1xf32>
      %430 = vector.extract %429[0, 0, 0] : f32 from vector<1x1x1xf32>
      %cst_227 = arith.constant 4.8828125E-4 : f32
      %431 = arith.mulf %430, %cst_227 : f32
      %432 = arith.mulf %431, %431 : f32
      %433 = arith.addf %421, %432 : f32
      %c3_228 = arith.constant 3 : index
      %c0_229 = arith.constant 0 : index
      %c0_230 = arith.constant 0 : index
      %434 = vector.load %arg5[%c3_228, %c0_229, %c0_230] : memref<15x8x128xf32, #tpu.memory_space<vmem>>, vector<1x8x128xf32>
      %435 = vector.shape_cast %434 : vector<1x8x128xf32> to vector<8x128xf32>
      %c3_231 = arith.constant 3 : index
      %c0_232 = arith.constant 0 : index
      %c0_233 = arith.constant 0 : index
      %436 = vector.load %arg4[%c3_231, %c0_232, %c0_233] : memref<15x8x128xf32, #tpu.memory_space<vmem>>, vector<1x8x128xf32>
      %437 = vector.shape_cast %436 : vector<1x8x128xf32> to vector<8x128xf32>
      %438 = arith.subf %435, %437 : vector<8x128xf32>
      %439 = vector.shape_cast %438 : vector<8x128xf32> to vector<1x8x128xf32>
      %cst_234 = arith.constant dense<0.000000e+00> : vector<1xf32>
      %440 = vector.multi_reduction <add>, %439, %cst_234 [1, 2] : vector<1x8x128xf32> to vector<1xf32>
      %441 = vector.shape_cast %440 : vector<1xf32> to vector<1x1x1xf32>
      %442 = vector.extract %441[0, 0, 0] : f32 from vector<1x1x1xf32>
      %cst_235 = arith.constant 4.8828125E-4 : f32
      %443 = arith.mulf %442, %cst_235 : f32
      %444 = arith.mulf %443, %443 : f32
      %445 = arith.addf %433, %444 : f32
      %c4_236 = arith.constant 4 : index
      %c0_237 = arith.constant 0 : index
      %c0_238 = arith.constant 0 : index
      %446 = vector.load %arg5[%c4_236, %c0_237, %c0_238] : memref<15x8x128xf32, #tpu.memory_space<vmem>>, vector<1x8x128xf32>
      %447 = vector.shape_cast %446 : vector<1x8x128xf32> to vector<8x128xf32>
      %c4_239 = arith.constant 4 : index
      %c0_240 = arith.constant 0 : index
      %c0_241 = arith.constant 0 : index
      %448 = vector.load %arg4[%c4_239, %c0_240, %c0_241] : memref<15x8x128xf32, #tpu.memory_space<vmem>>, vector<1x8x128xf32>
      %449 = vector.shape_cast %448 : vector<1x8x128xf32> to vector<8x128xf32>
      %450 = arith.subf %447, %449 : vector<8x128xf32>
      %451 = vector.shape_cast %450 : vector<8x128xf32> to vector<1x8x128xf32>
      %cst_242 = arith.constant dense<0.000000e+00> : vector<1xf32>
      %452 = vector.multi_reduction <add>, %451, %cst_242 [1, 2] : vector<1x8x128xf32> to vector<1xf32>
      %453 = vector.shape_cast %452 : vector<1xf32> to vector<1x1x1xf32>
      %454 = vector.extract %453[0, 0, 0] : f32 from vector<1x1x1xf32>
      %cst_243 = arith.constant 4.8828125E-4 : f32
      %455 = arith.mulf %454, %cst_243 : f32
      %456 = arith.mulf %455, %455 : f32
      %457 = arith.addf %445, %456 : f32
      %c5_244 = arith.constant 5 : index
      %c0_245 = arith.constant 0 : index
      %c0_246 = arith.constant 0 : index
      %458 = vector.load %arg5[%c5_244, %c0_245, %c0_246] : memref<15x8x128xf32, #tpu.memory_space<vmem>>, vector<1x8x128xf32>
      %459 = vector.shape_cast %458 : vector<1x8x128xf32> to vector<8x128xf32>
      %c5_247 = arith.constant 5 : index
      %c0_248 = arith.constant 0 : index
      %c0_249 = arith.constant 0 : index
      %460 = vector.load %arg4[%c5_247, %c0_248, %c0_249] : memref<15x8x128xf32, #tpu.memory_space<vmem>>, vector<1x8x128xf32>
      %461 = vector.shape_cast %460 : vector<1x8x128xf32> to vector<8x128xf32>
      %462 = arith.subf %459, %461 : vector<8x128xf32>
      %463 = vector.shape_cast %462 : vector<8x128xf32> to vector<1x8x128xf32>
      %cst_250 = arith.constant dense<0.000000e+00> : vector<1xf32>
      %464 = vector.multi_reduction <add>, %463, %cst_250 [1, 2] : vector<1x8x128xf32> to vector<1xf32>
      %465 = vector.shape_cast %464 : vector<1xf32> to vector<1x1x1xf32>
      %466 = vector.extract %465[0, 0, 0] : f32 from vector<1x1x1xf32>
      %cst_251 = arith.constant 4.8828125E-4 : f32
      %467 = arith.mulf %466, %cst_251 : f32
      %468 = arith.mulf %467, %467 : f32
      %469 = arith.addf %457, %468 : f32
      %c6_252 = arith.constant 6 : index
      %c0_253 = arith.constant 0 : index
      %c0_254 = arith.constant 0 : index
      %470 = vector.load %arg5[%c6_252, %c0_253, %c0_254] : memref<15x8x128xf32, #tpu.memory_space<vmem>>, vector<1x8x128xf32>
      %471 = vector.shape_cast %470 : vector<1x8x128xf32> to vector<8x128xf32>
      %c6_255 = arith.constant 6 : index
      %c0_256 = arith.constant 0 : index
      %c0_257 = arith.constant 0 : index
      %472 = vector.load %arg4[%c6_255, %c0_256, %c0_257] : memref<15x8x128xf32, #tpu.memory_space<vmem>>, vector<1x8x128xf32>
      %473 = vector.shape_cast %472 : vector<1x8x128xf32> to vector<8x128xf32>
      %474 = arith.subf %471, %473 : vector<8x128xf32>
      %475 = vector.shape_cast %474 : vector<8x128xf32> to vector<1x8x128xf32>
      %cst_258 = arith.constant dense<0.000000e+00> : vector<1xf32>
      %476 = vector.multi_reduction <add>, %475, %cst_258 [1, 2] : vector<1x8x128xf32> to vector<1xf32>
      %477 = vector.shape_cast %476 : vector<1xf32> to vector<1x1x1xf32>
      %478 = vector.extract %477[0, 0, 0] : f32 from vector<1x1x1xf32>
      %cst_259 = arith.constant 4.8828125E-4 : f32
      %479 = arith.mulf %478, %cst_259 : f32
      %480 = arith.mulf %479, %479 : f32
      %481 = arith.addf %469, %480 : f32
      %c7_260 = arith.constant 7 : index
      %c0_261 = arith.constant 0 : index
      %c0_262 = arith.constant 0 : index
      %482 = vector.load %arg5[%c7_260, %c0_261, %c0_262] : memref<15x8x128xf32, #tpu.memory_space<vmem>>, vector<1x8x128xf32>
      %483 = vector.shape_cast %482 : vector<1x8x128xf32> to vector<8x128xf32>
      %c7_263 = arith.constant 7 : index
      %c0_264 = arith.constant 0 : index
      %c0_265 = arith.constant 0 : index
      %484 = vector.load %arg4[%c7_263, %c0_264, %c0_265] : memref<15x8x128xf32, #tpu.memory_space<vmem>>, vector<1x8x128xf32>
      %485 = vector.shape_cast %484 : vector<1x8x128xf32> to vector<8x128xf32>
      %486 = arith.subf %483, %485 : vector<8x128xf32>
      %487 = vector.shape_cast %486 : vector<8x128xf32> to vector<1x8x128xf32>
      %cst_266 = arith.constant dense<0.000000e+00> : vector<1xf32>
      %488 = vector.multi_reduction <add>, %487, %cst_266 [1, 2] : vector<1x8x128xf32> to vector<1xf32>
      %489 = vector.shape_cast %488 : vector<1xf32> to vector<1x1x1xf32>
      %490 = vector.extract %489[0, 0, 0] : f32 from vector<1x1x1xf32>
      %cst_267 = arith.constant 4.8828125E-4 : f32
      %491 = arith.mulf %490, %cst_267 : f32
      %492 = arith.mulf %491, %491 : f32
      %493 = arith.addf %481, %492 : f32
      %c8_268 = arith.constant 8 : index
      %c0_269 = arith.constant 0 : index
      %c0_270 = arith.constant 0 : index
      %494 = vector.load %arg5[%c8_268, %c0_269, %c0_270] : memref<15x8x128xf32, #tpu.memory_space<vmem>>, vector<1x8x128xf32>
      %495 = vector.shape_cast %494 : vector<1x8x128xf32> to vector<8x128xf32>
      %c8_271 = arith.constant 8 : index
      %c0_272 = arith.constant 0 : index
      %c0_273 = arith.constant 0 : index
      %496 = vector.load %arg4[%c8_271, %c0_272, %c0_273] : memref<15x8x128xf32, #tpu.memory_space<vmem>>, vector<1x8x128xf32>
      %497 = vector.shape_cast %496 : vector<1x8x128xf32> to vector<8x128xf32>
      %498 = arith.subf %495, %497 : vector<8x128xf32>
      %499 = vector.shape_cast %498 : vector<8x128xf32> to vector<1x8x128xf32>
      %cst_274 = arith.constant dense<0.000000e+00> : vector<1xf32>
      %500 = vector.multi_reduction <add>, %499, %cst_274 [1, 2] : vector<1x8x128xf32> to vector<1xf32>
      %501 = vector.shape_cast %500 : vector<1xf32> to vector<1x1x1xf32>
      %502 = vector.extract %501[0, 0, 0] : f32 from vector<1x1x1xf32>
      %cst_275 = arith.constant 4.8828125E-4 : f32
      %503 = arith.mulf %502, %cst_275 : f32
      %504 = arith.mulf %503, %503 : f32
      %505 = arith.addf %493, %504 : f32
      %c9_276 = arith.constant 9 : index
      %c0_277 = arith.constant 0 : index
      %c0_278 = arith.constant 0 : index
      %506 = vector.load %arg5[%c9_276, %c0_277, %c0_278] : memref<15x8x128xf32, #tpu.memory_space<vmem>>, vector<1x8x128xf32>
      %507 = vector.shape_cast %506 : vector<1x8x128xf32> to vector<8x128xf32>
      %c9_279 = arith.constant 9 : index
      %c0_280 = arith.constant 0 : index
      %c0_281 = arith.constant 0 : index
      %508 = vector.load %arg4[%c9_279, %c0_280, %c0_281] : memref<15x8x128xf32, #tpu.memory_space<vmem>>, vector<1x8x128xf32>
      %509 = vector.shape_cast %508 : vector<1x8x128xf32> to vector<8x128xf32>
      %510 = arith.subf %507, %509 : vector<8x128xf32>
      %511 = vector.shape_cast %510 : vector<8x128xf32> to vector<1x8x128xf32>
      %cst_282 = arith.constant dense<0.000000e+00> : vector<1xf32>
      %512 = vector.multi_reduction <add>, %511, %cst_282 [1, 2] : vector<1x8x128xf32> to vector<1xf32>
      %513 = vector.shape_cast %512 : vector<1xf32> to vector<1x1x1xf32>
      %514 = vector.extract %513[0, 0, 0] : f32 from vector<1x1x1xf32>
      %cst_283 = arith.constant 4.8828125E-4 : f32
      %515 = arith.mulf %514, %cst_283 : f32
      %516 = arith.mulf %515, %515 : f32
      %517 = arith.addf %505, %516 : f32
      %c10_284 = arith.constant 10 : index
      %c0_285 = arith.constant 0 : index
      %c0_286 = arith.constant 0 : index
      %518 = vector.load %arg5[%c10_284, %c0_285, %c0_286] : memref<15x8x128xf32, #tpu.memory_space<vmem>>, vector<1x8x128xf32>
      %519 = vector.shape_cast %518 : vector<1x8x128xf32> to vector<8x128xf32>
      %c10_287 = arith.constant 10 : index
      %c0_288 = arith.constant 0 : index
      %c0_289 = arith.constant 0 : index
      %520 = vector.load %arg4[%c10_287, %c0_288, %c0_289] : memref<15x8x128xf32, #tpu.memory_space<vmem>>, vector<1x8x128xf32>
      %521 = vector.shape_cast %520 : vector<1x8x128xf32> to vector<8x128xf32>
      %522 = arith.subf %519, %521 : vector<8x128xf32>
      %523 = vector.shape_cast %522 : vector<8x128xf32> to vector<1x8x128xf32>
      %cst_290 = arith.constant dense<0.000000e+00> : vector<1xf32>
      %524 = vector.multi_reduction <add>, %523, %cst_290 [1, 2] : vector<1x8x128xf32> to vector<1xf32>
      %525 = vector.shape_cast %524 : vector<1xf32> to vector<1x1x1xf32>
      %526 = vector.extract %525[0, 0, 0] : f32 from vector<1x1x1xf32>
      %cst_291 = arith.constant 4.8828125E-4 : f32
      %527 = arith.mulf %526, %cst_291 : f32
      %528 = arith.mulf %527, %527 : f32
      %529 = arith.addf %517, %528 : f32
      %c11_292 = arith.constant 11 : index
      %c0_293 = arith.constant 0 : index
      %c0_294 = arith.constant 0 : index
      %530 = vector.load %arg5[%c11_292, %c0_293, %c0_294] : memref<15x8x128xf32, #tpu.memory_space<vmem>>, vector<1x8x128xf32>
      %531 = vector.shape_cast %530 : vector<1x8x128xf32> to vector<8x128xf32>
      %c11_295 = arith.constant 11 : index
      %c0_296 = arith.constant 0 : index
      %c0_297 = arith.constant 0 : index
      %532 = vector.load %arg4[%c11_295, %c0_296, %c0_297] : memref<15x8x128xf32, #tpu.memory_space<vmem>>, vector<1x8x128xf32>
      %533 = vector.shape_cast %532 : vector<1x8x128xf32> to vector<8x128xf32>
      %534 = arith.subf %531, %533 : vector<8x128xf32>
      %535 = vector.shape_cast %534 : vector<8x128xf32> to vector<1x8x128xf32>
      %cst_298 = arith.constant dense<0.000000e+00> : vector<1xf32>
      %536 = vector.multi_reduction <add>, %535, %cst_298 [1, 2] : vector<1x8x128xf32> to vector<1xf32>
      %537 = vector.shape_cast %536 : vector<1xf32> to vector<1x1x1xf32>
      %538 = vector.extract %537[0, 0, 0] : f32 from vector<1x1x1xf32>
      %cst_299 = arith.constant 4.8828125E-4 : f32
      %539 = arith.mulf %538, %cst_299 : f32
      %540 = arith.mulf %539, %539 : f32
      %541 = arith.addf %529, %540 : f32
      %c12_300 = arith.constant 12 : index
      %c0_301 = arith.constant 0 : index
      %c0_302 = arith.constant 0 : index
      %542 = vector.load %arg5[%c12_300, %c0_301, %c0_302] : memref<15x8x128xf32, #tpu.memory_space<vmem>>, vector<1x8x128xf32>
      %543 = vector.shape_cast %542 : vector<1x8x128xf32> to vector<8x128xf32>
      %c12_303 = arith.constant 12 : index
      %c0_304 = arith.constant 0 : index
      %c0_305 = arith.constant 0 : index
      %544 = vector.load %arg4[%c12_303, %c0_304, %c0_305] : memref<15x8x128xf32, #tpu.memory_space<vmem>>, vector<1x8x128xf32>
      %545 = vector.shape_cast %544 : vector<1x8x128xf32> to vector<8x128xf32>
      %546 = arith.subf %543, %545 : vector<8x128xf32>
      %547 = vector.shape_cast %546 : vector<8x128xf32> to vector<1x8x128xf32>
      %cst_306 = arith.constant dense<0.000000e+00> : vector<1xf32>
      %548 = vector.multi_reduction <add>, %547, %cst_306 [1, 2] : vector<1x8x128xf32> to vector<1xf32>
      %549 = vector.shape_cast %548 : vector<1xf32> to vector<1x1x1xf32>
      %550 = vector.extract %549[0, 0, 0] : f32 from vector<1x1x1xf32>
      %cst_307 = arith.constant 4.8828125E-4 : f32
      %551 = arith.mulf %550, %cst_307 : f32
      %552 = arith.mulf %551, %551 : f32
      %553 = arith.addf %541, %552 : f32
      %c13_308 = arith.constant 13 : index
      %c0_309 = arith.constant 0 : index
      %c0_310 = arith.constant 0 : index
      %554 = vector.load %arg5[%c13_308, %c0_309, %c0_310] : memref<15x8x128xf32, #tpu.memory_space<vmem>>, vector<1x8x128xf32>
      %555 = vector.shape_cast %554 : vector<1x8x128xf32> to vector<8x128xf32>
      %c13_311 = arith.constant 13 : index
      %c0_312 = arith.constant 0 : index
      %c0_313 = arith.constant 0 : index
      %556 = vector.load %arg4[%c13_311, %c0_312, %c0_313] : memref<15x8x128xf32, #tpu.memory_space<vmem>>, vector<1x8x128xf32>
      %557 = vector.shape_cast %556 : vector<1x8x128xf32> to vector<8x128xf32>
      %558 = arith.subf %555, %557 : vector<8x128xf32>
      %559 = vector.shape_cast %558 : vector<8x128xf32> to vector<1x8x128xf32>
      %cst_314 = arith.constant dense<0.000000e+00> : vector<1xf32>
      %560 = vector.multi_reduction <add>, %559, %cst_314 [1, 2] : vector<1x8x128xf32> to vector<1xf32>
      %561 = vector.shape_cast %560 : vector<1xf32> to vector<1x1x1xf32>
      %562 = vector.extract %561[0, 0, 0] : f32 from vector<1x1x1xf32>
      %cst_315 = arith.constant 4.8828125E-4 : f32
      %563 = arith.mulf %562, %cst_315 : f32
      %564 = arith.mulf %563, %563 : f32
      %565 = arith.addf %553, %564 : f32
      %c14_316 = arith.constant 14 : index
      %c0_317 = arith.constant 0 : index
      %c0_318 = arith.constant 0 : index
      %566 = vector.load %arg5[%c14_316, %c0_317, %c0_318] : memref<15x8x128xf32, #tpu.memory_space<vmem>>, vector<1x8x128xf32>
      %567 = vector.shape_cast %566 : vector<1x8x128xf32> to vector<8x128xf32>
      %c14_319 = arith.constant 14 : index
      %c0_320 = arith.constant 0 : index
      %c0_321 = arith.constant 0 : index
      %568 = vector.load %arg4[%c14_319, %c0_320, %c0_321] : memref<15x8x128xf32, #tpu.memory_space<vmem>>, vector<1x8x128xf32>
      %569 = vector.shape_cast %568 : vector<1x8x128xf32> to vector<8x128xf32>
      %570 = arith.subf %567, %569 : vector<8x128xf32>
      %571 = vector.shape_cast %570 : vector<8x128xf32> to vector<1x8x128xf32>
      %cst_322 = arith.constant dense<0.000000e+00> : vector<1xf32>
      %572 = vector.multi_reduction <add>, %571, %cst_322 [1, 2] : vector<1x8x128xf32> to vector<1xf32>
      %573 = vector.shape_cast %572 : vector<1xf32> to vector<1x1x1xf32>
      %574 = vector.extract %573[0, 0, 0] : f32 from vector<1x1x1xf32>
      %cst_323 = arith.constant 4.8828125E-4 : f32
      %575 = arith.mulf %574, %cst_323 : f32
      %576 = arith.mulf %575, %575 : f32
      %577 = arith.addf %565, %576 : f32
      %cst_324 = arith.constant 0.0666666701 : f32
      %578 = arith.mulf %577, %cst_324 : f32
      %c0_325 = arith.constant 0 : index
      %c0_326 = arith.constant 0 : index
      %579 = memref.load %arg3[%c0_325, %c0_326] : memref<1x1xf32, #tpu.memory_space<smem>>
      memref.store %578, %arg3[%c0_325, %c0_326] : memref<1x1xf32, #tpu.memory_space<smem>>
    } else {
    }
    return
  }
  func.func @transform_0(%arg0: i32) -> (i32, i32, i32) {
    %c0_i32 = arith.constant 0 : i32
    %c0_i32_0 = arith.constant 0 : i32
    %c0_i32_1 = arith.constant 0 : i32
    return %c0_i32, %arg0, %c0_i32_0 : i32, i32, i32
  }
  func.func @transform_1(%arg0: i32) -> (i32, i32, i32) {
    %c0_i32 = arith.constant 0 : i32
    %c0_i32_0 = arith.constant 0 : i32
    %c0_i32_1 = arith.constant 0 : i32
    return %c0_i32, %arg0, %c0_i32_0 : i32, i32, i32
  }
  func.func @transform_2(%arg0: i32) -> (i32, i32) {
    %c0_i32 = arith.constant 0 : i32
    %c0_i32_0 = arith.constant 0 : i32
    %c0_i32_1 = arith.constant 0 : i32
    return %c0_i32, %c0_i32_0 : i32, i32
  }
}

</mosaic_0001>

<llo_original>
// kernel: tpu_custom_call.1
$region0: #{tpu_custom_call.1}
  #allocation0 [shape = 'u32[]', space=smem, size = 0x4, offset = 0x4, fixed_abs, tag = 'smem constant byte address 0x4 - core index']
  #allocation1 [shape = 'u32[144,128]{1,0:T(1,128)}', space=vmem, size = 0x12000, scoped, tag = 'internal scratch']
  #allocation2 [shape = 'f32[15,8,128]{2,1,0:T(8,128)}', space=vmem, size = 0xf000, scoped, tag = 'scratch operand']
  #allocation3 [shape = 'f32[15,8,128]{2,1,0:T(8,128)}', space=vmem, size = 0xf000, scoped, tag = 'scratch operand']
  #allocation10 [shape = 's32[]', space=sflag, size = 0x4, offset = 0, fixed_abs, tag = 'sflag constant byte address 0x0 - dummy sync flag']
  %s0 = inlined_call_operand.hbm [shape: f32[6,32,128], index: 0, kind: input, shape index: {}]
  %s1 = inlined_call_operand.hbm [shape: f32[6,16,128], index: 1, kind: input, shape index: {}]
  %s2 = inlined_call_operand.hbm [shape: f32[1,1], index: 2, kind: output, shape index: {}]
  %s3 = sld [smem:[#allocation0]]
  $region34: #{tpu_custom_call.1} parent=0
    _
  %s5 = ssub.s32 1, %s3
  %s6 = scalar_select 0, %s5, %s3
  $region1: #{tpu_custom_call.1} parent=0
    #allocation4 [shape = 'u8[49152]{0}', space=vmem, size = 0xc000, scoped, tag = 'input window, operand 0, single buffered']
    #allocation5 [shape = 's32[1]{0}', space=sflag, size = 0x4, scoped, tag = 'scoped memory for tpu_custom_call.1']
    #allocation6 [shape = 's32[1]{0}', space=sflag, size = 0x4, scoped, tag = 'scoped memory for tpu_custom_call.1']
    #allocation7 [shape = 'u8[49152]{0}', space=vmem, size = 0xc000, scoped, tag = 'input window, operand 1, single buffered']
    #allocation8 [shape = 's32[1]{0}', space=sflag, size = 0x4, scoped, tag = 'scoped memory for tpu_custom_call.1']
    #allocation9 [shape = 'u8[512]{0}', space=smem, size = 0x200, scoped, tag = 'output window, operand 0, single buffered']
    %7 = vsyncpa [#allocation5], 0
    %8 = vsyncpa [#allocation8], 0
    %9 = vsyncpa [#allocation6], 0
    // Predicated region
    $region2: #{tpu_custom_call.1} parent=1 // pred_check
      _
    $region3: #{tpu_custom_call.1} parent=1 // pred_check_branch
      %11 = sbr.rel (0) target = $region5
    $region4: #{tpu_custom_call.1} parent=1 // pred_region
      #allocation11 [shape = 'u32[6]{0}', space=smem, size = 0x18, scoped, tag = 'DMA stride descriptor']
      %s13 = ssub.s32 1536, 1536
      %14 = vsyncadd [#allocation5], %s13
      %s16 = sshll.u32 1, 14
      %s17 = sxor.u32 4294967295, %s16
      %s19 = sld [smem:[#allocation0]]
      %s20 = sadd.s32 2, %s19
      %s22 = sshll.u32 7, 26
      %s23 = sxor.u32 4294967295, %s22
      %s24 = sand.u32 0, %s23
      %s25 = sshll.u32 %s20, 26
      %s26 = sor.u32 %s24, %s25
      %s27 = sshll.u32 [#allocation4], 4
      %s28 = int_to_ptr.vmem [resolvable:$true] %s27
      %34 = sst [smem:[#allocation11]] 512
      %s35 = scalar_lea.smem [#allocation11], 1
      %36 = sst [smem:[%s35]] 256
      %s37 = scalar_lea.smem [#allocation11], 2
      %38 = sst [smem:[%s37]] 2
      %s39 = scalar_lea.smem [#allocation11], 3
      %40 = sst [smem:[%s39]] 128
      %s41 = scalar_lea.smem [#allocation11], 4
      %42 = sst [smem:[%s41]] 128
      %s43 = scalar_lea.smem [#allocation11], 5
      %44 = sst [smem:[%s43]] 8
      %46 = dma.general %s0, 1536, %s28, [#allocation5], 131072, [#allocation11], %s26, 0
    $region5: #{tpu_custom_call.1} parent=1 // pred_fallthru
      _
    // Predicated region
    $region6: #{tpu_custom_call.1} parent=1 // pred_check
      _
    $region7: #{tpu_custom_call.1} parent=1 // pred_check_branch
      %48 = sbr.rel (0) target = $region9
    $region8: #{tpu_custom_call.1} parent=1 // pred_region
      %s50 = ssub.s32 1536, 1536
      %51 = vsyncadd [#allocation8], %s50
      %s52 = sshll.u32 [#allocation7], 4
      %s53 = int_to_ptr.vmem [resolvable:$true] %s52
      %58 = dma.hbm_to_vmem [thread:$0]  %s1, 1536, %s53, [#allocation8], 128, 128, 8
    $region9: #{tpu_custom_call.1} parent=1 // pred_fallthru
      _
    // Predicated region
    $region10: #{tpu_custom_call.1} parent=1 // pred_check
      _
    $region11: #{tpu_custom_call.1} parent=1 // pred_check_branch
      %60 = sbr.rel (0) target = $region13
    $region12: #{tpu_custom_call.1} parent=1 // pred_region
      %61 = dma.done [#allocation5], 1536
    $region13: #{tpu_custom_call.1} parent=1 // pred_fallthru
      _
    // Predicated region
    $region14: #{tpu_custom_call.1} parent=1 // pred_check
      _
    $region15: #{tpu_custom_call.1} parent=1 // pred_check_branch
      %63 = sbr.rel (0) target = $region17
    $region16: #{tpu_custom_call.1} parent=1 // pred_region
      %64 = dma.done [#allocation8], 1536
    $region17: #{tpu_custom_call.1} parent=1 // pred_fallthru
      _
    %p65 = scmp.eq.s32.totalorder 0, 0
    // Predicated region
    $region18: #{tpu_custom_call.1} parent=1 // pred_check
      %p66 = pneg %p65
    $region19: #{tpu_custom_call.1} parent=1 // pred_check_branch
      %68 = sbr.rel (%p66) target = $region21
    $region20: #{tpu_custom_call.1} parent=1 // pred_region
      %69 = vst [vmem:[#allocation2] sm:$0xff] 0.0
      %70 = vst [vmem:[#allocation2 + $0x8] sm:$0xff] 0.0
      %71 = vst [vmem:[#allocation2 + $0x10] sm:$0xff] 0.0
      %72 = vst [vmem:[#allocation2 + $0x18] sm:$0xff] 0.0
      %73 = vst [vmem:[#allocation2 + $0x20] sm:$0xff] 0.0
      %74 = vst [vmem:[#allocation2 + $0x28] sm:$0xff] 0.0
      %75 = vst [vmem:[#allocation2 + $0x30] sm:$0xff] 0.0
      %76 = vst [vmem:[#allocation2 + $0x38] sm:$0xff] 0.0
      %77 = vst [vmem:[#allocation2 + $0x40] sm:$0xff] 0.0
      %78 = vst [vmem:[#allocation2 + $0x48] sm:$0xff] 0.0
      %79 = vst [vmem:[#allocation2 + $0x50] sm:$0xff] 0.0
      %80 = vst [vmem:[#allocation2 + $0x58] sm:$0xff] 0.0
      %81 = vst [vmem:[#allocation2 + $0x60] sm:$0xff] 0.0
      %82 = vst [vmem:[#allocation2 + $0x68] sm:$0xff] 0.0
      %83 = vst [vmem:[#allocation2 + $0x70] sm:$0xff] 0.0
      %84 = vst [vmem:[#allocation3] sm:$0xff] 0.0
      %85 = vst [vmem:[#allocation3 + $0x8] sm:$0xff] 0.0
      %86 = vst [vmem:[#allocation3 + $0x10] sm:$0xff] 0.0
      %87 = vst [vmem:[#allocation3 + $0x18] sm:$0xff] 0.0
      %88 = vst [vmem:[#allocation3 + $0x20] sm:$0xff] 0.0
      %89 = vst [vmem:[#allocation3 + $0x28] sm:$0xff] 0.0
      %90 = vst [vmem:[#allocation3 + $0x30] sm:$0xff] 0.0
      %91 = vst [vmem:[#allocation3 + $0x38] sm:$0xff] 0.0
      %92 = vst [vmem:[#allocation3 + $0x40] sm:$0xff] 0.0
      %93 = vst [vmem:[#allocation3 + $0x48] sm:$0xff] 0.0
      %94 = vst [vmem:[#allocation3 + $0x50] sm:$0xff] 0.0
      %95 = vst [vmem:[#allocation3 + $0x58] sm:$0xff] 0.0
      %96 = vst [vmem:[#allocation3 + $0x60] sm:$0xff] 0.0
      %97 = vst [vmem:[#allocation3 + $0x68] sm:$0xff] 0.0
      %98 = vst [vmem:[#allocation3 + $0x70] sm:$0xff] 0.0
    $region21: #{tpu_custom_call.1} parent=1 // pred_fallthru
      _
    %v99 = vld [vmem:[#allocation4] sm:$0xff]
    %v100 = vld [vmem:[#allocation4 + $0x8] sm:$0xff]
    %v101 = vld [vmem:[#allocation4 + $0x10] sm:$0xff]
    %v102 = vld [vmem:[#allocation4 + $0x18] sm:$0xff]
    %v103 = vld [vmem:[#allocation4 + $0x20] sm:$0xff]
    %v104 = vld [vmem:[#allocation4 + $0x28] sm:$0xff]
    %v105 = vld [vmem:[#allocation4 + $0x30] sm:$0xff]
    %v106 = vld [vmem:[#allocation4 + $0x38] sm:$0xff]
    %v107 = vld [vmem:[#allocation4 + $0x40] sm:$0xff]
    %v108 = vld [vmem:[#allocation4 + $0x48] sm:$0xff]
    %v109 = vld [vmem:[#allocation4 + $0x50] sm:$0xff]
    %v110 = vld [vmem:[#allocation4 + $0x58] sm:$0xff]
    %v111 = vld [vmem:[#allocation7] sm:$0xff]
    %v112 = vld [vmem:[#allocation7 + $0x8] sm:$0xff]
    %v113 = vld [vmem:[#allocation7 + $0x10] sm:$0xff]
    %v114 = vld [vmem:[#allocation7 + $0x18] sm:$0xff]
    %v115 = vld [vmem:[#allocation7 + $0x20] sm:$0xff]
    %v116 = vld [vmem:[#allocation7 + $0x28] sm:$0xff]
    %v117 = vld [vmem:[#allocation7 + $0x30] sm:$0xff]
    %v118 = vld [vmem:[#allocation7 + $0x38] sm:$0xff]
    %v119 = vld [vmem:[#allocation7 + $0x40] sm:$0xff]
    %v120 = vld [vmem:[#allocation7 + $0x48] sm:$0xff]
    %v121 = vld [vmem:[#allocation7 + $0x50] sm:$0xff]
    %v122 = vld [vmem:[#allocation7 + $0x58] sm:$0xff]
    %v123 = vmul.f32 %v99, %v101
    %v124 = vmul.f32 %v100, %v102
    %v125 = vld [vmem:[#allocation2] sm:$0xff]
    %v126 = vadd.f32 %v123, %v124
    %v127 = vadd.f32 %v125, %v126
    %128 = vst [vmem:[#allocation2] sm:$0xff] %v127
    %v129 = vmul.f32 %v111, %v113
    %v130 = vmul.f32 %v112, %v114
    %v131 = vld [vmem:[#allocation3] sm:$0xff]
    %v132 = vadd.f32 %v129, %v130
    %v133 = vadd.f32 %v131, %v132
    %134 = vst [vmem:[#allocation3] sm:$0xff] %v133
    %v135 = vmul.f32 %v99, %v103
    %v136 = vmul.f32 %v100, %v104
    %s137 = scalar_lea.vmem [#allocation2], 8
    %v138 = vld [vmem:[%s137] sm:$0xff]
    %v139 = vadd.f32 %v135, %v136
    %v140 = vadd.f32 %v138, %v139
    %141 = vst [vmem:[%s137] sm:$0xff] %v140
    %v142 = vmul.f32 %v111, %v115
    %v143 = vmul.f32 %v112, %v116
    %s144 = scalar_lea.vmem [#allocation3], 8
    %v145 = vld [vmem:[%s144] sm:$0xff]
    %v146 = vadd.f32 %v142, %v143
    %v147 = vadd.f32 %v145, %v146
    %148 = vst [vmem:[%s144] sm:$0xff] %v147
    %v149 = vmul.f32 %v99, %v105
    %v150 = vmul.f32 %v100, %v106
    %s151 = scalar_lea.vmem [#allocation2], 16
    %v152 = vld [vmem:[%s151] sm:$0xff]
    %v153 = vadd.f32 %v149, %v150
    %v154 = vadd.f32 %v152, %v153
    %155 = vst [vmem:[%s151] sm:$0xff] %v154
    %v156 = vmul.f32 %v111, %v117
    %v157 = vmul.f32 %v112, %v118
    %s158 = scalar_lea.vmem [#allocation3], 16
    %v159 = vld [vmem:[%s158] sm:$0xff]
    %v160 = vadd.f32 %v156, %v157
    %v161 = vadd.f32 %v159, %v160
    %162 = vst [vmem:[%s158] sm:$0xff] %v161
    %v163 = vmul.f32 %v99, %v107
    %v164 = vmul.f32 %v100, %v108
    %s165 = scalar_lea.vmem [#allocation2], 24
    %v166 = vld [vmem:[%s165] sm:$0xff]
    %v167 = vadd.f32 %v163, %v164
    %v168 = vadd.f32 %v166, %v167
    %169 = vst [vmem:[%s165] sm:$0xff] %v168
    %v170 = vmul.f32 %v111, %v119
    %v171 = vmul.f32 %v112, %v120
    %s172 = scalar_lea.vmem [#allocation3], 24
    %v173 = vld [vmem:[%s172] sm:$0xff]
    %v174 = vadd.f32 %v170, %v171
    %v175 = vadd.f32 %v173, %v174
    %176 = vst [vmem:[%s172] sm:$0xff] %v175
    %v177 = vmul.f32 %v99, %v109
    %v178 = vmul.f32 %v100, %v110
    %s179 = scalar_lea.vmem [#allocation2], 32
    %v180 = vld [vmem:[%s179] sm:$0xff]
    %v181 = vadd.f32 %v177, %v178
    %v182 = vadd.f32 %v180, %v181
    %183 = vst [vmem:[%s179] sm:$0xff] %v182
    %v184 = vmul.f32 %v111, %v121
    %v185 = vmul.f32 %v112, %v122
    %s186 = scalar_lea.vmem [#allocation3], 32
    %v187 = vld [vmem:[%s186] sm:$0xff]
    %v188 = vadd.f32 %v184, %v185
    %v189 = vadd.f32 %v187, %v188
    %190 = vst [vmem:[%s186] sm:$0xff] %v189
    %v191 = vmul.f32 %v101, %v103
    %v192 = vmul.f32 %v102, %v104
    %s193 = scalar_lea.vmem [#allocation2], 40
    %v194 = vld [vmem:[%s193] sm:$0xff]
    %v195 = vadd.f32 %v191, %v192
    %v196 = vadd.f32 %v194, %v195
    %197 = vst [vmem:[%s193] sm:$0xff] %v196
    %v198 = vmul.f32 %v113, %v115
    %v199 = vmul.f32 %v114, %v116
    %s200 = scalar_lea.vmem [#allocation3], 40
    %v201 = vld [vmem:[%s200] sm:$0xff]
    %v202 = vadd.f32 %v198, %v199
    %v203 = vadd.f32 %v201, %v202
    %204 = vst [vmem:[%s200] sm:$0xff] %v203
    %v205 = vmul.f32 %v101, %v105
    %v206 = vmul.f32 %v102, %v106
    %s207 = scalar_lea.vmem [#allocation2], 48
    %v208 = vld [vmem:[%s207] sm:$0xff]
    %v209 = vadd.f32 %v205, %v206
    %v210 = vadd.f32 %v208, %v209
    %211 = vst [vmem:[%s207] sm:$0xff] %v210
    %v212 = vmul.f32 %v113, %v117
    %v213 = vmul.f32 %v114, %v118
    %s214 = scalar_lea.vmem [#allocation3], 48
    %v215 = vld [vmem:[%s214] sm:$0xff]
    %v216 = vadd.f32 %v212, %v213
    %v217 = vadd.f32 %v215, %v216
    %218 = vst [vmem:[%s214] sm:$0xff] %v217
    %v219 = vmul.f32 %v101, %v107
    %v220 = vmul.f32 %v102, %v108
    %s221 = scalar_lea.vmem [#allocation2], 56
    %v222 = vld [vmem:[%s221] sm:$0xff]
    %v223 = vadd.f32 %v219, %v220
    %v224 = vadd.f32 %v222, %v223
    %225 = vst [vmem:[%s221] sm:$0xff] %v224
    %v226 = vmul.f32 %v113, %v119
    %v227 = vmul.f32 %v114, %v120
    %s228 = scalar_lea.vmem [#allocation3], 56
    %v229 = vld [vmem:[%s228] sm:$0xff]
    %v230 = vadd.f32 %v226, %v227
    %v231 = vadd.f32 %v229, %v230
    %232 = vst [vmem:[%s228] sm:$0xff] %v231
    %v233 = vmul.f32 %v101, %v109
    %v234 = vmul.f32 %v102, %v110
    %s235 = scalar_lea.vmem [#allocation2], 64
    %v236 = vld [vmem:[%s235] sm:$0xff]
    %v237 = vadd.f32 %v233, %v234
    %v238 = vadd.f32 %v236, %v237
    %239 = vst [vmem:[%s235] sm:$0xff] %v238
    %v240 = vmul.f32 %v113, %v121
    %v241 = vmul.f32 %v114, %v122
    %s242 = scalar_lea.vmem [#allocation3], 64
    %v243 = vld [vmem:[%s242] sm:$0xff]
    %v244 = vadd.f32 %v240, %v241
    %v245 = vadd.f32 %v243, %v244
    %246 = vst [vmem:[%s242] sm:$0xff] %v245
    %v247 = vmul.f32 %v103, %v105
    %v248 = vmul.f32 %v104, %v106
    %s249 = scalar_lea.vmem [#allocation2], 72
    %v250 = vld [vmem:[%s249] sm:$0xff]
    %v251 = vadd.f32 %v247, %v248
    %v252 = vadd.f32 %v250, %v251
    %253 = vst [vmem:[%s249] sm:$0xff] %v252
    %v254 = vmul.f32 %v115, %v117
    %v255 = vmul.f32 %v116, %v118
    %s256 = scalar_lea.vmem [#allocation3], 72
    %v257 = vld [vmem:[%s256] sm:$0xff]
    %v258 = vadd.f32 %v254, %v255
    %v259 = vadd.f32 %v257, %v258
    %260 = vst [vmem:[%s256] sm:$0xff] %v259
    %v261 = vmul.f32 %v103, %v107
    %v262 = vmul.f32 %v104, %v108
    %s263 = scalar_lea.vmem [#allocation2], 80
    %v264 = vld [vmem:[%s263] sm:$0xff]
    %v265 = vadd.f32 %v261, %v262
    %v266 = vadd.f32 %v264, %v265
    %267 = vst [vmem:[%s263] sm:$0xff] %v266
    %v268 = vmul.f32 %v115, %v119
    %v269 = vmul.f32 %v116, %v120
    %s270 = scalar_lea.vmem [#allocation3], 80
    %v271 = vld [vmem:[%s270] sm:$0xff]
    %v272 = vadd.f32 %v268, %v269
    %v273 = vadd.f32 %v271, %v272
    %274 = vst [vmem:[%s270] sm:$0xff] %v273
    %v275 = vmul.f32 %v103, %v109
    %v276 = vmul.f32 %v104, %v110
    %s277 = scalar_lea.vmem [#allocation2], 88
    %v278 = vld [vmem:[%s277] sm:$0xff]
    %v279 = vadd.f32 %v275, %v276
    %v280 = vadd.f32 %v278, %v279
    %281 = vst [vmem:[%s277] sm:$0xff] %v280
    %v282 = vmul.f32 %v115, %v121
    %v283 = vmul.f32 %v116, %v122
    %s284 = scalar_lea.vmem [#allocation3], 88
    %v285 = vld [vmem:[%s284] sm:$0xff]
    %v286 = vadd.f32 %v282, %v283
    %v287 = vadd.f32 %v285, %v286
    %288 = vst [vmem:[%s284] sm:$0xff] %v287
    %v289 = vmul.f32 %v105, %v107
    %v290 = vmul.f32 %v106, %v108
    %s291 = scalar_lea.vmem [#allocation2], 96
    %v292 = vld [vmem:[%s291] sm:$0xff]
    %v293 = vadd.f32 %v289, %v290
    %v294 = vadd.f32 %v292, %v293
    %295 = vst [vmem:[%s291] sm:$0xff] %v294
    %v296 = vmul.f32 %v117, %v119
    %v297 = vmul.f32 %v118, %v120
    %s298 = scalar_lea.vmem [#allocation3], 96
    %v299 = vld [vmem:[%s298] sm:$0xff]
    %v300 = vadd.f32 %v296, %v297
    %v301 = vadd.f32 %v299, %v300
    %302 = vst [vmem:[%s298] sm:$0xff] %v301
    %v303 = vmul.f32 %v105, %v109
    %v304 = vmul.f32 %v106, %v110
    %s305 = scalar_lea.vmem [#allocation2], 104
    %v306 = vld [vmem:[%s305] sm:$0xff]
    %v307 = vadd.f32 %v303, %v304
    %v308 = vadd.f32 %v306, %v307
    %309 = vst [vmem:[%s305] sm:$0xff] %v308
    %v310 = vmul.f32 %v117, %v121
    %v311 = vmul.f32 %v118, %v122
    %s312 = scalar_lea.vmem [#allocation3], 104
    %v313 = vld [vmem:[%s312] sm:$0xff]
    %v314 = vadd.f32 %v310, %v311
    %v315 = vadd.f32 %v313, %v314
    %316 = vst [vmem:[%s312] sm:$0xff] %v315
    %v317 = vmul.f32 %v107, %v109
    %v318 = vmul.f32 %v108, %v110
    %s319 = scalar_lea.vmem [#allocation2], 112
    %v320 = vld [vmem:[%s319] sm:$0xff]
    %v321 = vadd.f32 %v317, %v318
    %v322 = vadd.f32 %v320, %v321
    %323 = vst [vmem:[%s319] sm:$0xff] %v322
    %v324 = vmul.f32 %v119, %v121
    %v325 = vmul.f32 %v120, %v122
    %s326 = scalar_lea.vmem [#allocation3], 112
    %v327 = vld [vmem:[%s326] sm:$0xff]
    %v328 = vadd.f32 %v324, %v325
    %v329 = vadd.f32 %v327, %v328
    %330 = vst [vmem:[%s326] sm:$0xff] %v329
    // Predicated region
    $region22: #{tpu_custom_call.1} parent=1 // pred_check
      %p331 = pneg %p65
    $region23: #{tpu_custom_call.1} parent=1 // pred_check_branch
      %333 = sbr.rel (%p331) target = $region25
    $region24: #{tpu_custom_call.1} parent=1 // pred_region
      %v334 = vld [vmem:[#allocation3] sm:$0xff]
      %v335 = vld [vmem:[#allocation2] sm:$0xff]
      %v336 = vsub.f32 %v334, %v335
      %337 = vadd.xlane.f32.xlu0 %v336
      %v338 = vpop.xlane.xlu0 %337
      %v339 = vrot.slane %v338, 4
      %v340 = vadd.f32 %v338, %v339
      %v341 = vrot.slane %v340, 2
      %v342 = vadd.f32 %v340, %v341
      %v343 = vrot.slane %v342, 1
      %v344 = vadd.f32 %v342, %v343
      %s345 = vtos %v344
      %s346 = smul.f32 %s345, 0.00048828125
      %s347 = smul.f32 %s346, %s346
      %s348 = sadd.f32 %s347, 0.0
      %v349 = vld [vmem:[%s144] sm:$0xff]
      %v350 = vld [vmem:[%s137] sm:$0xff]
      %v351 = vsub.f32 %v349, %v350
      %352 = vadd.xlane.f32.xlu0 %v351
      %v353 = vpop.xlane.xlu0 %352
      %v354 = vrot.slane %v353, 4
      %v355 = vadd.f32 %v353, %v354
      %v356 = vrot.slane %v355, 2
      %v357 = vadd.f32 %v355, %v356
      %v358 = vrot.slane %v357, 1
      %v359 = vadd.f32 %v357, %v358
      %s360 = vtos %v359
      %s361 = smul.f32 %s360, 0.00048828125
      %s362 = smul.f32 %s361, %s361
      %s363 = sadd.f32 %s348, %s362
      %v364 = vld [vmem:[%s158] sm:$0xff]
      %v365 = vld [vmem:[%s151] sm:$0xff]
      %v366 = vsub.f32 %v364, %v365
      %367 = vadd.xlane.f32.xlu0 %v366
      %v368 = vpop.xlane.xlu0 %367
      %v369 = vrot.slane %v368, 4
      %v370 = vadd.f32 %v368, %v369
      %v371 = vrot.slane %v370, 2
      %v372 = vadd.f32 %v370, %v371
      %v373 = vrot.slane %v372, 1
      %v374 = vadd.f32 %v372, %v373
      %s375 = vtos %v374
      %s376 = smul.f32 %s375, 0.00048828125
      %s377 = smul.f32 %s376, %s376
      %s378 = sadd.f32 %s363, %s377
      %v379 = vld [vmem:[%s172] sm:$0xff]
      %v380 = vld [vmem:[%s165] sm:$0xff]
      %v381 = vsub.f32 %v379, %v380
      %382 = vadd.xlane.f32.xlu0 %v381
      %v383 = vpop.xlane.xlu0 %382
      %v384 = vrot.slane %v383, 4
      %v385 = vadd.f32 %v383, %v384
      %v386 = vrot.slane %v385, 2
      %v387 = vadd.f32 %v385, %v386
      %v388 = vrot.slane %v387, 1
      %v389 = vadd.f32 %v387, %v388
      %s390 = vtos %v389
      %s391 = smul.f32 %s390, 0.00048828125
      %s392 = smul.f32 %s391, %s391
      %s393 = sadd.f32 %s378, %s392
      %v394 = vld [vmem:[%s186] sm:$0xff]
      %v395 = vld [vmem:[%s179] sm:$0xff]
      %v396 = vsub.f32 %v394, %v395
      %397 = vadd.xlane.f32.xlu0 %v396
      %v398 = vpop.xlane.xlu0 %397
      %v399 = vrot.slane %v398, 4
      %v400 = vadd.f32 %v398, %v399
      %v401 = vrot.slane %v400, 2
      %v402 = vadd.f32 %v400, %v401
      %v403 = vrot.slane %v402, 1
      %v404 = vadd.f32 %v402, %v403
      %s405 = vtos %v404
      %s406 = smul.f32 %s405, 0.00048828125
      %s407 = smul.f32 %s406, %s406
      %s408 = sadd.f32 %s393, %s407
      %v409 = vld [vmem:[%s200] sm:$0xff]
      %v410 = vld [vmem:[%s193] sm:$0xff]
      %v411 = vsub.f32 %v409, %v410
      %412 = vadd.xlane.f32.xlu0 %v411
      %v413 = vpop.xlane.xlu0 %412
      %v414 = vrot.slane %v413, 4
      %v415 = vadd.f32 %v413, %v414
      %v416 = vrot.slane %v415, 2
      %v417 = vadd.f32 %v415, %v416
      %v418 = vrot.slane %v417, 1
      %v419 = vadd.f32 %v417, %v418
      %s420 = vtos %v419
      %s421 = smul.f32 %s420, 0.00048828125
      %s422 = smul.f32 %s421, %s421
      %s423 = sadd.f32 %s408, %s422
      %v424 = vld [vmem:[%s214] sm:$0xff]
      %v425 = vld [vmem:[%s207] sm:$0xff]
      %v426 = vsub.f32 %v424, %v425
      %427 = vadd.xlane.f32.xlu0 %v426
      %v428 = vpop.xlane.xlu0 %427
      %v429 = vrot.slane %v428, 4
      %v430 = vadd.f32 %v428, %v429
      %v431 = vrot.slane %v430, 2
      %v432 = vadd.f32 %v430, %v431
      %v433 = vrot.slane %v432, 1
      %v434 = vadd.f32 %v432, %v433
      %s435 = vtos %v434
      %s436 = smul.f32 %s435, 0.00048828125
      %s437 = smul.f32 %s436, %s436
      %s438 = sadd.f32 %s423, %s437
      %v439 = vld [vmem:[%s228] sm:$0xff]
      %v440 = vld [vmem:[%s221] sm:$0xff]
      %v441 = vsub.f32 %v439, %v440
      %442 = vadd.xlane.f32.xlu0 %v441
      %v443 = vpop.xlane.xlu0 %442
      %v444 = vrot.slane %v443, 4
      %v445 = vadd.f32 %v443, %v444
      %v446 = vrot.slane %v445, 2
      %v447 = vadd.f32 %v445, %v446
      %v448 = vrot.slane %v447, 1
      %v449 = vadd.f32 %v447, %v448
      %s450 = vtos %v449
      %s451 = smul.f32 %s450, 0.00048828125
      %s452 = smul.f32 %s451, %s451
      %s453 = sadd.f32 %s438, %s452
      %v454 = vld [vmem:[%s242] sm:$0xff]
      %v455 = vld [vmem:[%s235] sm:$0xff]
      %v456 = vsub.f32 %v454, %v455
      %457 = vadd.xlane.f32.xlu0 %v456
      %v458 = vpop.xlane.xlu0 %457
      %v459 = vrot.slane %v458, 4
      %v460 = vadd.f32 %v458, %v459
      %v461 = vrot.slane %v460, 2
      %v462 = vadd.f32 %v460, %v461
      %v463 = vrot.slane %v462, 1
      %v464 = vadd.f32 %v462, %v463
      %s465 = vtos %v464
      %s466 = smul.f32 %s465, 0.00048828125
      %s467 = smul.f32 %s466, %s466
      %s468 = sadd.f32 %s453, %s467
      %v469 = vld [vmem:[%s256] sm:$0xff]
      %v470 = vld [vmem:[%s249] sm:$0xff]
      %v471 = vsub.f32 %v469, %v470
      %472 = vadd.xlane.f32.xlu0 %v471
      %v473 = vpop.xlane.xlu0 %472
      %v474 = vrot.slane %v473, 4
      %v475 = vadd.f32 %v473, %v474
      %v476 = vrot.slane %v475, 2
      %v477 = vadd.f32 %v475, %v476
      %v478 = vrot.slane %v477, 1
      %v479 = vadd.f32 %v477, %v478
      %s480 = vtos %v479
      %s481 = smul.f32 %s480, 0.00048828125
      %s482 = smul.f32 %s481, %s481
      %s483 = sadd.f32 %s468, %s482
      %v484 = vld [vmem:[%s270] sm:$0xff]
      %v485 = vld [vmem:[%s263] sm:$0xff]
      %v486 = vsub.f32 %v484, %v485
      %487 = vadd.xlane.f32.xlu0 %v486
      %v488 = vpop.xlane.xlu0 %487
      %v489 = vrot.slane %v488, 4
      %v490 = vadd.f32 %v488, %v489
      %v491 = vrot.slane %v490, 2
      %v492 = vadd.f32 %v490, %v491
      %v493 = vrot.slane %v492, 1
      %v494 = vadd.f32 %v492, %v493
      %s495 = vtos %v494
      %s496 = smul.f32 %s495, 0.00048828125
      %s497 = smul.f32 %s496, %s496
      %s498 = sadd.f32 %s483, %s497
      %v499 = vld [vmem:[%s284] sm:$0xff]
      %v500 = vld [vmem:[%s277] sm:$0xff]
      %v501 = vsub.f32 %v499, %v500
      %502 = vadd.xlane.f32.xlu0 %v501
      %v503 = vpop.xlane.xlu0 %502
      %v504 = vrot.slane %v503, 4
      %v505 = vadd.f32 %v503, %v504
      %v506 = vrot.slane %v505, 2
      %v507 = vadd.f32 %v505, %v506
      %v508 = vrot.slane %v507, 1
      %v509 = vadd.f32 %v507, %v508
      %s510 = vtos %v509
      %s511 = smul.f32 %s510, 0.00048828125
      %s512 = smul.f32 %s511, %s511
      %s513 = sadd.f32 %s498, %s512
      %v514 = vld [vmem:[%s298] sm:$0xff]
      %v515 = vld [vmem:[%s291] sm:$0xff]
      %v516 = vsub.f32 %v514, %v515
      %517 = vadd.xlane.f32.xlu0 %v516
      %v518 = vpop.xlane.xlu0 %517
      %v519 = vrot.slane %v518, 4
      %v520 = vadd.f32 %v518, %v519
      %v521 = vrot.slane %v520, 2
      %v522 = vadd.f32 %v520, %v521
      %v523 = vrot.slane %v522, 1
      %v524 = vadd.f32 %v522, %v523
      %s525 = vtos %v524
      %s526 = smul.f32 %s525, 0.00048828125
      %s527 = smul.f32 %s526, %s526
      %s528 = sadd.f32 %s513, %s527
      %v529 = vld [vmem:[%s312] sm:$0xff]
      %v530 = vld [vmem:[%s305] sm:$0xff]
      %v531 = vsub.f32 %v529, %v530
      %532 = vadd.xlane.f32.xlu0 %v531
      %v533 = vpop.xlane.xlu0 %532
      %v534 = vrot.slane %v533, 4
      %v535 = vadd.f32 %v533, %v534
      %v536 = vrot.slane %v535, 2
      %v537 = vadd.f32 %v535, %v536
      %v538 = vrot.slane %v537, 1
      %v539 = vadd.f32 %v537, %v538
      %s540 = vtos %v539
      %s541 = smul.f32 %s540, 0.00048828125
      %s542 = smul.f32 %s541, %s541
      %s543 = sadd.f32 %s528, %s542
      %v544 = vld [vmem:[%s326] sm:$0xff]
      %v545 = vld [vmem:[%s319] sm:$0xff]
      %v546 = vsub.f32 %v544, %v545
      %547 = vadd.xlane.f32.xlu0 %v546
      %v548 = vpop.xlane.xlu0 %547
      %v549 = vrot.slane %v548, 4
      %v550 = vadd.f32 %v548, %v549
      %v551 = vrot.slane %v550, 2
      %v552 = vadd.f32 %v550, %v551
      %v553 = vrot.slane %v552, 1
      %v554 = vadd.f32 %v552, %v553
      %s555 = vtos %v554
      %s556 = smul.f32 %s555, 0.00048828125
      %s557 = smul.f32 %s556, %s556
      %s558 = sadd.f32 %s543, %s557
      %s559 = smul.f32 %s558, 0.06666667
      %s560 = scalar_lea.smem [#allocation9], 0
      %561 = sst [smem:[%s560]] %s559
    $region25: #{tpu_custom_call.1} parent=1 // pred_fallthru
      _
    // Predicated region
    $region26: #{tpu_custom_call.1} parent=1 // pred_check
      _
    $region27: #{tpu_custom_call.1} parent=1 // pred_check_branch
      %563 = sbr.rel (0) target = $region29
    $region28: #{tpu_custom_call.1} parent=1 // pred_region
      %s565 = ssub.s32 16, 16
      %566 = vsyncadd [#allocation6], %s565
      %569 = dma.smem_to_hbm [#allocation9], 16, %s2, [#allocation6]
    $region29: #{tpu_custom_call.1} parent=1 // pred_fallthru
      _
    // Predicated region
    $region30: #{tpu_custom_call.1} parent=1 // pred_check
      _
    $region31: #{tpu_custom_call.1} parent=1 // pred_check_branch
      %571 = sbr.rel (0) target = $region33
    $region32: #{tpu_custom_call.1} parent=1 // pred_region
      %572 = dma.done [#allocation6], 16
    $region33: #{tpu_custom_call.1} parent=1 // pred_fallthru
      _
    %573 = sfence
    %574 = vsyncpa [#allocation5], 1
    %575 = vsyncpa [#allocation8], 1
    %576 = vsyncpa [#allocation6], 1

</llo_original>
